<compile_context>
chip_gen: v6e
topology: v6e:2x2x1
jax: 0.10.0
libtpu: 0.0.40
codegen_flags: <defaults>
</compile_context>

<pallas_src>
import functools

import jax
import jax.numpy as jnp
from jax.experimental import pallas as pl
from jax.experimental.pallas import tpu as pltpu

BN_EPS = 1e-5
LANE = 128
SUBLANE = 8


# ---------------------------------------------------------------------------
# Small helpers (plain JAX, run outside the kernel)
# ---------------------------------------------------------------------------
def _round_up(n, m):
    return ((n + m - 1) // m) * m


def _pad2(a, rows, cols):
    """Zero-pad a 2-D array to (rows, cols)."""
    return jnp.zeros((rows, cols), a.dtype).at[:a.shape[0], :a.shape[1]].set(a)


def _fold_bn(w1, b1, gamma, beta, mean, var):
    """Fold eval-mode BatchNorm1d into the preceding Linear: y = (x@W1 + b1 - mean)*s + beta."""
    scale = gamma * jax.lax.rsqrt(var + BN_EPS)          # (1, H)
    return w1 * scale, (b1 - mean) * scale + beta


# ---------------------------------------------------------------------------
# Fused Pallas kernel: 3x GINConv + per-layer global_add_pool + MLP head
# ---------------------------------------------------------------------------
def gin_fused_kernel(adj_ref, x_ref, pool_ref,
                     c1w1_ref, c1b1_ref, c1w2_ref, c1b2_ref,
                     c2w1_ref, c2b1_ref, c2w2_ref, c2b2_ref,
                     c3w1_ref, c3b1_ref, c3w2_ref, c3b2_ref,
                     l1w_ref, l1b_ref, l2w_ref, l2b_ref, l4w_ref, l4b_ref,
                     out_ref):
    f32, bf16 = jnp.float32, jnp.bfloat16
    adj = adj_ref[...]                                   # (Np, Np) bf16, (1+eps)I baked in
    pool = pool_ref[...]                                 # (Gp, Np) bf16
    hp = c1w2_ref.shape[1]                               # padded hidden width (static)

    def conv(feat_bf16, w1_ref, b1_ref, w2_ref, b2_ref):
        # neighborhood aggregation (self term baked into adj diagonal), bf16 -> f32 acc
        agg = jnp.dot(adj, feat_bf16, preferred_element_type=f32)
        # Linear 1 (BatchNorm folded in) + ReLU (epilogue stays f32)
        h = jnp.dot(agg.astype(bf16), w1_ref[...], preferred_element_type=f32) + b1_ref[...]
        h = jnp.maximum(h, 0.0)
        # Linear 2 + ReLU
        h = jnp.dot(h.astype(bf16), w2_ref[...], preferred_element_type=f32) + b2_ref[...]
        return jnp.maximum(h, 0.0)

    h1 = conv(x_ref[...], c1w1_ref, c1b1_ref, c1w2_ref, c1b2_ref)
    h2 = conv(h1.astype(bf16), c2w1_ref, c2b1_ref, c2w2_ref, c2b2_ref)
    h3 = conv(h2.astype(bf16), c3w1_ref, c3b1_ref, c3w2_ref, c3b2_ref)

    # global_add_pool each layer IMMEDIATELY -> tiny (Gp, Hp) results, h_i dies right away.
    p1 = jnp.dot(pool, h1.astype(bf16), preferred_element_type=f32)
    p2 = jnp.dot(pool, h2.astype(bf16), preferred_element_type=f32)
    p3 = jnp.dot(pool, h3.astype(bf16), preferred_element_type=f32)

    # lin1 applied blockwise to the virtual concat [p1 | p2 | p3] (static, sublane-aligned
    # row slices of the weight ref) -- no VMEM concat slab, no extra store/reload pass.
    g = (jnp.dot(p1.astype(bf16), l1w_ref[0:hp, :], preferred_element_type=f32)
         + jnp.dot(p2.astype(bf16), l1w_ref[hp:2 * hp, :], preferred_element_type=f32)
         + jnp.dot(p3.astype(bf16), l1w_ref[2 * hp:3 * hp, :], preferred_element_type=f32)
         + l1b_ref[...])
    g = jnp.maximum(g, 0.0)
    # dropout = identity (eval mode)
    g = jnp.dot(g.astype(bf16), l2w_ref[...], preferred_element_type=f32) + l2b_ref[...]
    g = jnp.maximum(g, 0.0)
    out_ref[...] = (jnp.dot(g.astype(bf16), l4w_ref[...], preferred_element_type=f32)
                    + l4b_ref[...])


# ---------------------------------------------------------------------------
# Parameter preparation: BN folding + 128-lane-dense zero padding.
# Call ONCE outside the jitted forward; pass the result in as stable buffers.
# ---------------------------------------------------------------------------
def prepare_gin_params(params):
    node_feature = params["conv1"]["w1"].shape[0]
    dim_h = params["conv1"]["w2"].shape[1]

    # dim_h is fixed by the torch module; pad to the 128-lane vreg width (native tile on
    # v5e's 4x128 MXU; accepted under-fill on v6e/v7x's 256-wide MXU for fixed dim_h).
    f_pad = _round_up(max(node_feature, LANE), LANE)
    h_pad = _round_up(max(dim_h, LANE), LANE)
    h2_pad = _round_up(max(2 * dim_h, LANE), LANE)
    out_pad = LANE

    def pw(w, r, c):                                     # weights -> bf16
        return _pad2(w, r, c).astype(jnp.bfloat16)

    def pb(b, c):                                        # biases stay f32
        return _pad2(b, 1, c)

    flat = []
    in_pads = [f_pad, h_pad, h_pad]
    for i in range(3):
        p = params[f"conv{i + 1}"]
        w1f, b1f = _fold_bn(p["w1"], p["b1"], p["gamma"], p["beta"], p["mean"], p["var"])
        flat += [pw(w1f, in_pads[i], h_pad), pb(b1f, h_pad),
                 pw(p["w2"], h_pad, h_pad), pb(p["b2"], h_pad)]

    # lin1 rows must follow the padded [p1 | p2 | p3] block layout (blocks of h_pad)
    w1, b1 = params["lin1"]
    wl1 = jnp.zeros((3 * h_pad, h2_pad), jnp.float32)
    for j in range(3):
        wl1 = wl1.at[j * h_pad:j * h_pad + dim_h, :2 * dim_h].set(
            w1[j * dim_h:(j + 1) * dim_h, :])
    flat += [wl1.astype(jnp.bfloat16), pb(b1, h2_pad)]

    w2, b2 = params["lin2"]
    flat += [pw(w2, h2_pad, h2_pad), pb(b2, h2_pad)]
    w4, b4 = params["lin4"]
    flat += [pw(w4, h2_pad, out_pad), pb(b4, out_pad)]

    return tuple(jax.device_put(a) for a in flat)


# ---------------------------------------------------------------------------
# Forward pass (eval mode) — single fused pallas_call
# ---------------------------------------------------------------------------
def gin_forward(padded_params, x, edge_index, batch, num_graphs, eps=0.0):
    """padded_params: output of prepare_gin_params (pre-padded, bf16 weights / f32 biases).
    x: [N, node_feature] f32, edge_index: [2, E] int32 (row0=src, row1=tgt),
    batch: [N] int32 (sorted, as PyG batches are).
    Returns (K_prediction, mu_prediction), each shape [num_graphs]."""
    n, _ = x.shape
    f_pad = padded_params[0].shape[0]          # conv1 W1 rows
    h_pad = padded_params[2].shape[1]          # conv1 W2 cols
    out_pad = padded_params[16].shape[1]       # lin4 cols

    n_pad = _round_up(max(n, LANE), LANE)
    g_pad = _round_up(max(num_graphs, SUBLANE), SUBLANE)

    # Dense A_hat = (1+eps) I + A in ONE bf16 scatter pass: append self-loop "edges" with
    # weight (1+eps).  Padded node rows/cols stay zero.  (bf16 counts exact up to 256.)
    src, tgt = edge_index[0], edge_index[1]
    idx = jnp.arange(n, dtype=src.dtype)
    rows = jnp.concatenate([tgt, idx])
    cols = jnp.concatenate([src, idx])
    vals = jnp.concatenate([jnp.ones(src.shape, jnp.bfloat16),
                            jnp.full((n,), 1.0 + eps, jnp.bfloat16)])
    adj = jnp.zeros((n_pad, n_pad), jnp.bfloat16).at[rows, cols].add(vals)

    x_p = _pad2(x, n_pad, f_pad).astype(jnp.bfloat16)

    # Dense pooling matrix for global_add_pool, built directly in bf16 (no f32 pass);
    # padded graph rows / node cols are zero.
    pool = jnp.zeros((g_pad, n_pad), jnp.bfloat16).at[:, :n].set(
        (batch[None, :] == jnp.arange(g_pad, dtype=batch.dtype)[:, None]
         ).astype(jnp.bfloat16))

    inputs = (adj, x_p, pool, *padded_params)

    # Advisory cost estimate for XLA's scheduler.
    h2_pad = padded_params[13].shape[1]
    flops = 0
    for d_in in (f_pad, h_pad, h_pad):
        flops += 2 * n_pad * n_pad * d_in            # A_hat @ feat
        flops += 2 * n_pad * d_in * h_pad            # @ W1
        flops += 2 * n_pad * h_pad * h_pad           # @ W2
    flops += 3 * 2 * g_pad * n_pad * h_pad           # per-layer pooling
    flops += 2 * g_pad * (3 * h_pad * h2_pad + h2_pad * h2_pad + h2_pad * out_pad)
    bytes_accessed = (sum(int(a.size) * a.dtype.itemsize for a in inputs)
                      + g_pad * out_pad * 4)

    # Explicit VMEM budget: everything (double-buffered inputs + output + headroom).
    vmem_need = 2 * sum(int(a.size) * a.dtype.itemsize for a in inputs) \
        + 2 * g_pad * out_pad * 4 + (2 << 20)
    vmem_limit = int(min(64 << 20, max(vmem_need, 16 << 20)))

    out = pl.pallas_call(
        gin_fused_kernel,
        out_shape=jax.ShapeDtypeStruct((g_pad, out_pad), jnp.float32),
        cost_estimate=pl.CostEstimate(flops=flops, transcendentals=0,
                                      bytes_accessed=bytes_accessed),
        compiler_params=pltpu.CompilerParams(vmem_limit_bytes=vmem_limit),
    )(*inputs)

    k_pred = jnp.squeeze(out[:num_graphs, 0])
    mu_pred = jnp.squeeze(out[:num_graphs, 1])
    return k_pred, mu_pred


# ---------------------------------------------------------------------------
# Parameter init (shapes follow the torch module)
# ---------------------------------------------------------------------------
def init_gin_params(key, node_feature, dim_h):
    def lin(k, fan_in, fan_out):
        kw, kb = jax.random.split(k)
        w = jax.random.normal(kw, (fan_in, fan_out), jnp.float32) * 0.1
        b = jax.random.normal(kb, (1, fan_out), jnp.float32) * 0.1
        return w, b

    keys = jax.random.split(key, 10)
    params = {}
    in_dims = [node_feature, dim_h, dim_h]
    for i in range(3):
        w1, b1 = lin(keys[2 * i], in_dims[i], dim_h)
        w2, b2 = lin(keys[2 * i + 1], dim_h, dim_h)
        params[f"conv{i + 1}"] = dict(
            w1=w1, b1=b1, w2=w2, b2=b2,
            gamma=jnp.ones((1, dim_h), jnp.float32),
            beta=jnp.zeros((1, dim_h), jnp.float32),
            mean=jnp.zeros((1, dim_h), jnp.float32),
            var=jnp.ones((1, dim_h), jnp.float32),
        )
    params["lin1"] = lin(keys[6], dim_h * 3, dim_h * 2)
    params["lin2"] = lin(keys[7], dim_h * 2, dim_h * 2)
    params["lin4"] = lin(keys[8], dim_h * 2, 2)
    return params


# ---------------------------------------------------------------------------
# Pure-JAX reference (same BN-fold + bf16-operand/f32-accumulation precision)
# ---------------------------------------------------------------------------
def gin_forward_ref(params, x, edge_index, batch, num_graphs, eps=0.0):
    n = x.shape[0]
    src, tgt = edge_index[0], edge_index[1]
    adj = jnp.zeros((n, n), jnp.float32).at[tgt, src].add(1.0)
    adj = adj + (1.0 + eps) * jnp.eye(n, dtype=jnp.float32)
    pool = (batch[None, :] == jnp.arange(num_graphs, dtype=batch.dtype)[:, None]
            ).astype(jnp.float32)

    def dot(a, b):
        return jnp.dot(a.astype(jnp.bfloat16), b.astype(jnp.bfloat16),
                       preferred_element_type=jnp.float32)

    def conv(p, feat):
        w1f, b1f = _fold_bn(p["w1"], p["b1"], p["gamma"], p["beta"], p["mean"], p["var"])
        h = jnp.maximum(dot(dot(adj, feat), w1f) + b1f, 0.0)
        return jnp.maximum(dot(h, p["w2"]) + p["b2"], 0.0)

    h1 = conv(params["conv1"], x)
    h2 = conv(params["conv2"], h1)
    h3 = conv(params["conv3"], h2)
    g = dot(pool, jnp.concatenate([h1, h2, h3], axis=1))
    (w1, b1), (w2, b2), (w4, b4) = params["lin1"], params["lin2"], params["lin4"]
    g = jnp.maximum(dot(g, w1) + b1, 0.0)
    g = jnp.maximum(dot(g, w2) + b2, 0.0)
    out = dot(g, w4) + b4
    return jnp.squeeze(out[:, 0]), jnp.squeeze(out[:, 1])


# ---------------------------------------------------------------------------
if __name__ == "__main__":
    key = jax.random.PRNGKey(0)
    k_x, k_edge, k_params = jax.random.split(key, 3)

    NODE_FEATURE = 16
    DIM_H = 32
    N_NODES = 32
    N_EDGES = 64
    N_GRAPHS = 4

    x = jax.random.normal(k_x, (N_NODES, NODE_FEATURE), jnp.float32)
    edge_index = jax.random.randint(k_edge, (2, N_EDGES), 0, N_NODES, jnp.int32)
    # nodes evenly assigned to graphs (sorted, as PyG batches are)
    batch = jnp.repeat(jnp.arange(N_GRAPHS, dtype=jnp.int32), N_NODES // N_GRAPHS)

    params = init_gin_params(k_params, NODE_FEATURE, DIM_H)

    # Hoisted out of the per-call jitted path: BN fold + padding + bf16 cast run once.
    padded_params = prepare_gin_params(params)

    fwd = jax.jit(functools.partial(gin_forward, num_graphs=N_GRAPHS))
    k_pred, mu_pred = fwd(padded_params, x, edge_index, batch)
    jax.block_until_ready((k_pred, mu_pred))

    k_ref, mu_ref = gin_forward_ref(params, x, edge_index, batch, N_GRAPHS)
    assert k_pred.shape == (N_GRAPHS,) and mu_pred.shape == (N_GRAPHS,)
    assert jnp.allclose(k_pred, k_ref, atol=1e-2, rtol=1e-2)
    assert jnp.allclose(mu_pred, mu_ref, atol=1e-2, rtol=1e-2)

    print("KERNEL_OK")
</pallas_src>

<mosaic_0001>
module attributes {stable_mosaic.version = 11 : i64} {
  func.func @gin_fused_kernel(%arg0: memref<128x128xbf16, #tpu.memory_space<vmem>>, %arg1: memref<128x128xbf16, #tpu.memory_space<vmem>>, %arg2: memref<8x128xbf16, #tpu.memory_space<vmem>>, %arg3: memref<128x128xbf16, #tpu.memory_space<vmem>>, %arg4: memref<1x128xf32, #tpu.memory_space<vmem>>, %arg5: memref<128x128xbf16, #tpu.memory_space<vmem>>, %arg6: memref<1x128xf32, #tpu.memory_space<vmem>>, %arg7: memref<128x128xbf16, #tpu.memory_space<vmem>>, %arg8: memref<1x128xf32, #tpu.memory_space<vmem>>, %arg9: memref<128x128xbf16, #tpu.memory_space<vmem>>, %arg10: memref<1x128xf32, #tpu.memory_space<vmem>>, %arg11: memref<128x128xbf16, #tpu.memory_space<vmem>>, %arg12: memref<1x128xf32, #tpu.memory_space<vmem>>, %arg13: memref<128x128xbf16, #tpu.memory_space<vmem>>, %arg14: memref<1x128xf32, #tpu.memory_space<vmem>>, %arg15: memref<384x128xbf16, #tpu.memory_space<vmem>>, %arg16: memref<1x128xf32, #tpu.memory_space<vmem>>, %arg17: memref<128x128xbf16, #tpu.memory_space<vmem>>, %arg18: memref<1x128xf32, #tpu.memory_space<vmem>>, %arg19: memref<128x128xbf16, #tpu.memory_space<vmem>>, %arg20: memref<1x128xf32, #tpu.memory_space<vmem>>, %arg21: memref<8x128xf32, #tpu.memory_space<vmem>>) attributes {dimension_semantics = [], scalar_prefetch = 0 : i64, scratch_operands = 0 : i64, tpu.core_type = #tpu.core_type<tc>} {
    %c0 = arith.constant 0 : index
    %c0_0 = arith.constant 0 : index
    %0 = vector.load %arg0[%c0, %c0_0] : memref<128x128xbf16, #tpu.memory_space<vmem>>, vector<128x128xbf16>
    %c0_1 = arith.constant 0 : index
    %c0_2 = arith.constant 0 : index
    %1 = vector.load %arg2[%c0_1, %c0_2] : memref<8x128xbf16, #tpu.memory_space<vmem>>, vector<8x128xbf16>
    %c0_3 = arith.constant 0 : index
    %c0_4 = arith.constant 0 : index
    %2 = vector.load %arg1[%c0_3, %c0_4] : memref<128x128xbf16, #tpu.memory_space<vmem>>, vector<128x128xbf16>
    %cst = arith.constant dense<0.000000e+00> : vector<128x128xf32>
    %3 = tpu.matmul %0, %2, %cst {dimension_numbers = #tpu.dot_dimension_numbers<[1], [0], [0], [1], [0, 0, 1, 1], [], []>} : vector<128x128xbf16>, vector<128x128xbf16>, vector<128x128xf32> -> vector<128x128xf32>
    %4 = arith.truncf %3 : vector<128x128xf32> to vector<128x128xbf16>
    %c0_5 = arith.constant 0 : index
    %c0_6 = arith.constant 0 : index
    %5 = vector.load %arg3[%c0_5, %c0_6] : memref<128x128xbf16, #tpu.memory_space<vmem>>, vector<128x128xbf16>
    %cst_7 = arith.constant dense<0.000000e+00> : vector<128x128xf32>
    %6 = tpu.matmul %4, %5, %cst_7 {dimension_numbers = #tpu.dot_dimension_numbers<[1], [0], [0], [1], [0, 0, 1, 1], [], []>} : vector<128x128xbf16>, vector<128x128xbf16>, vector<128x128xf32> -> vector<128x128xf32>
    %c0_8 = arith.constant 0 : index
    %c0_9 = arith.constant 0 : index
    %7 = vector.load %arg4[%c0_8, %c0_9] : memref<1x128xf32, #tpu.memory_space<vmem>>, vector<1x128xf32>
    %8 = vector.broadcast %7 : vector<1x128xf32> to vector<128x128xf32>
    %9 = arith.addf %6, %8 : vector<128x128xf32>
    %cst_10 = arith.constant 0.000000e+00 : f32
    %10 = vector.broadcast %cst_10 : f32 to vector<128x128xf32>
    %11 = arith.maximumf %9, %10 : vector<128x128xf32>
    %12 = arith.truncf %11 : vector<128x128xf32> to vector<128x128xbf16>
    %c0_11 = arith.constant 0 : index
    %c0_12 = arith.constant 0 : index
    %13 = vector.load %arg5[%c0_11, %c0_12] : memref<128x128xbf16, #tpu.memory_space<vmem>>, vector<128x128xbf16>
    %cst_13 = arith.constant dense<0.000000e+00> : vector<128x128xf32>
    %14 = tpu.matmul %12, %13, %cst_13 {dimension_numbers = #tpu.dot_dimension_numbers<[1], [0], [0], [1], [0, 0, 1, 1], [], []>} : vector<128x128xbf16>, vector<128x128xbf16>, vector<128x128xf32> -> vector<128x128xf32>
    %c0_14 = arith.constant 0 : index
    %c0_15 = arith.constant 0 : index
    %15 = vector.load %arg6[%c0_14, %c0_15] : memref<1x128xf32, #tpu.memory_space<vmem>>, vector<1x128xf32>
    %16 = vector.broadcast %15 : vector<1x128xf32> to vector<128x128xf32>
    %17 = arith.addf %14, %16 : vector<128x128xf32>
    %cst_16 = arith.constant 0.000000e+00 : f32
    %18 = vector.broadcast %cst_16 : f32 to vector<128x128xf32>
    %19 = arith.maximumf %17, %18 : vector<128x128xf32>
    %20 = arith.truncf %19 : vector<128x128xf32> to vector<128x128xbf16>
    %cst_17 = arith.constant dense<0.000000e+00> : vector<128x128xf32>
    %21 = tpu.matmul %0, %20, %cst_17 {dimension_numbers = #tpu.dot_dimension_numbers<[1], [0], [0], [1], [0, 0, 1, 1], [], []>} : vector<128x128xbf16>, vector<128x128xbf16>, vector<128x128xf32> -> vector<128x128xf32>
    %22 = arith.truncf %21 : vector<128x128xf32> to vector<128x128xbf16>
    %c0_18 = arith.constant 0 : index
    %c0_19 = arith.constant 0 : index
    %23 = vector.load %arg7[%c0_18, %c0_19] : memref<128x128xbf16, #tpu.memory_space<vmem>>, vector<128x128xbf16>
    %cst_20 = arith.constant dense<0.000000e+00> : vector<128x128xf32>
    %24 = tpu.matmul %22, %23, %cst_20 {dimension_numbers = #tpu.dot_dimension_numbers<[1], [0], [0], [1], [0, 0, 1, 1], [], []>} : vector<128x128xbf16>, vector<128x128xbf16>, vector<128x128xf32> -> vector<128x128xf32>
    %c0_21 = arith.constant 0 : index
    %c0_22 = arith.constant 0 : index
    %25 = vector.load %arg8[%c0_21, %c0_22] : memref<1x128xf32, #tpu.memory_space<vmem>>, vector<1x128xf32>
    %26 = vector.broadcast %25 : vector<1x128xf32> to vector<128x128xf32>
    %27 = arith.addf %24, %26 : vector<128x128xf32>
    %cst_23 = arith.constant 0.000000e+00 : f32
    %28 = vector.broadcast %cst_23 : f32 to vector<128x128xf32>
    %29 = arith.maximumf %27, %28 : vector<128x128xf32>
    %30 = arith.truncf %29 : vector<128x128xf32> to vector<128x128xbf16>
    %c0_24 = arith.constant 0 : index
    %c0_25 = arith.constant 0 : index
    %31 = vector.load %arg9[%c0_24, %c0_25] : memref<128x128xbf16, #tpu.memory_space<vmem>>, vector<128x128xbf16>
    %cst_26 = arith.constant dense<0.000000e+00> : vector<128x128xf32>
    %32 = tpu.matmul %30, %31, %cst_26 {dimension_numbers = #tpu.dot_dimension_numbers<[1], [0], [0], [1], [0, 0, 1, 1], [], []>} : vector<128x128xbf16>, vector<128x128xbf16>, vector<128x128xf32> -> vector<128x128xf32>
    %c0_27 = arith.constant 0 : index
    %c0_28 = arith.constant 0 : index
    %33 = vector.load %arg10[%c0_27, %c0_28] : memref<1x128xf32, #tpu.memory_space<vmem>>, vector<1x128xf32>
    %34 = vector.broadcast %33 : vector<1x128xf32> to vector<128x128xf32>
    %35 = arith.addf %32, %34 : vector<128x128xf32>
    %cst_29 = arith.constant 0.000000e+00 : f32
    %36 = vector.broadcast %cst_29 : f32 to vector<128x128xf32>
    %37 = arith.maximumf %35, %36 : vector<128x128xf32>
    %38 = arith.truncf %37 : vector<128x128xf32> to vector<128x128xbf16>
    %cst_30 = arith.constant dense<0.000000e+00> : vector<128x128xf32>
    %39 = tpu.matmul %0, %38, %cst_30 {dimension_numbers = #tpu.dot_dimension_numbers<[1], [0], [0], [1], [0, 0, 1, 1], [], []>} : vector<128x128xbf16>, vector<128x128xbf16>, vector<128x128xf32> -> vector<128x128xf32>
    %40 = arith.truncf %39 : vector<128x128xf32> to vector<128x128xbf16>
    %c0_31 = arith.constant 0 : index
    %c0_32 = arith.constant 0 : index
    %41 = vector.load %arg11[%c0_31, %c0_32] : memref<128x128xbf16, #tpu.memory_space<vmem>>, vector<128x128xbf16>
    %cst_33 = arith.constant dense<0.000000e+00> : vector<128x128xf32>
    %42 = tpu.matmul %40, %41, %cst_33 {dimension_numbers = #tpu.dot_dimension_numbers<[1], [0], [0], [1], [0, 0, 1, 1], [], []>} : vector<128x128xbf16>, vector<128x128xbf16>, vector<128x128xf32> -> vector<128x128xf32>
    %c0_34 = arith.constant 0 : index
    %c0_35 = arith.constant 0 : index
    %43 = vector.load %arg12[%c0_34, %c0_35] : memref<1x128xf32, #tpu.memory_space<vmem>>, vector<1x128xf32>
    %44 = vector.broadcast %43 : vector<1x128xf32> to vector<128x128xf32>
    %45 = arith.addf %42, %44 : vector<128x128xf32>
    %cst_36 = arith.constant 0.000000e+00 : f32
    %46 = vector.broadcast %cst_36 : f32 to vector<128x128xf32>
    %47 = arith.maximumf %45, %46 : vector<128x128xf32>
    %48 = arith.truncf %47 : vector<128x128xf32> to vector<128x128xbf16>
    %c0_37 = arith.constant 0 : index
    %c0_38 = arith.constant 0 : index
    %49 = vector.load %arg13[%c0_37, %c0_38] : memref<128x128xbf16, #tpu.memory_space<vmem>>, vector<128x128xbf16>
    %cst_39 = arith.constant dense<0.000000e+00> : vector<128x128xf32>
    %50 = tpu.matmul %48, %49, %cst_39 {dimension_numbers = #tpu.dot_dimension_numbers<[1], [0], [0], [1], [0, 0, 1, 1], [], []>} : vector<128x128xbf16>, vector<128x128xbf16>, vector<128x128xf32> -> vector<128x128xf32>
    %c0_40 = arith.constant 0 : index
    %c0_41 = arith.constant 0 : index
    %51 = vector.load %arg14[%c0_40, %c0_41] : memref<1x128xf32, #tpu.memory_space<vmem>>, vector<1x128xf32>
    %52 = vector.broadcast %51 : vector<1x128xf32> to vector<128x128xf32>
    %53 = arith.addf %50, %52 : vector<128x128xf32>
    %cst_42 = arith.constant 0.000000e+00 : f32
    %54 = vector.broadcast %cst_42 : f32 to vector<128x128xf32>
    %55 = arith.maximumf %53, %54 : vector<128x128xf32>
    %56 = arith.truncf %19 : vector<128x128xf32> to vector<128x128xbf16>
    %cst_43 = arith.constant dense<0.000000e+00> : vector<8x128xf32>
    %57 = tpu.matmul %1, %56, %cst_43 {dimension_numbers = #tpu.dot_dimension_numbers<[1], [0], [0], [1], [0, 0, 1, 1], [], []>} : vector<8x128xbf16>, vector<128x128xbf16>, vector<8x128xf32> -> vector<8x128xf32>
    %58 = arith.truncf %37 : vector<128x128xf32> to vector<128x128xbf16>
    %cst_44 = arith.constant dense<0.000000e+00> : vector<8x128xf32>
    %59 = tpu.matmul %1, %58, %cst_44 {dimension_numbers = #tpu.dot_dimension_numbers<[1], [0], [0], [1], [0, 0, 1, 1], [], []>} : vector<8x128xbf16>, vector<128x128xbf16>, vector<8x128xf32> -> vector<8x128xf32>
    %60 = arith.truncf %55 : vector<128x128xf32> to vector<128x128xbf16>
    %cst_45 = arith.constant dense<0.000000e+00> : vector<8x128xf32>
    %61 = tpu.matmul %1, %60, %cst_45 {dimension_numbers = #tpu.dot_dimension_numbers<[1], [0], [0], [1], [0, 0, 1, 1], [], []>} : vector<8x128xbf16>, vector<128x128xbf16>, vector<8x128xf32> -> vector<8x128xf32>
    %62 = arith.truncf %57 : vector<8x128xf32> to vector<8x128xbf16>
    %c0_46 = arith.constant 0 : index
    %c0_47 = arith.constant 0 : index
    %63 = vector.load %arg15[%c0_46, %c0_47] : memref<384x128xbf16, #tpu.memory_space<vmem>>, vector<128x128xbf16>
    %cst_48 = arith.constant dense<0.000000e+00> : vector<8x128xf32>
    %64 = tpu.matmul %62, %63, %cst_48 {dimension_numbers = #tpu.dot_dimension_numbers<[1], [0], [0], [1], [0, 0, 1, 1], [], []>} : vector<8x128xbf16>, vector<128x128xbf16>, vector<8x128xf32> -> vector<8x128xf32>
    %65 = arith.truncf %59 : vector<8x128xf32> to vector<8x128xbf16>
    %c128 = arith.constant 128 : index
    %c0_49 = arith.constant 0 : index
    %66 = vector.load %arg15[%c128, %c0_49] : memref<384x128xbf16, #tpu.memory_space<vmem>>, vector<128x128xbf16>
    %cst_50 = arith.constant dense<0.000000e+00> : vector<8x128xf32>
    %67 = tpu.matmul %65, %66, %cst_50 {dimension_numbers = #tpu.dot_dimension_numbers<[1], [0], [0], [1], [0, 0, 1, 1], [], []>} : vector<8x128xbf16>, vector<128x128xbf16>, vector<8x128xf32> -> vector<8x128xf32>
    %68 = arith.addf %64, %67 : vector<8x128xf32>
    %69 = arith.truncf %61 : vector<8x128xf32> to vector<8x128xbf16>
    %c256 = arith.constant 256 : index
    %c0_51 = arith.constant 0 : index
    %70 = vector.load %arg15[%c256, %c0_51] : memref<384x128xbf16, #tpu.memory_space<vmem>>, vector<128x128xbf16>
    %cst_52 = arith.constant dense<0.000000e+00> : vector<8x128xf32>
    %71 = tpu.matmul %69, %70, %cst_52 {dimension_numbers = #tpu.dot_dimension_numbers<[1], [0], [0], [1], [0, 0, 1, 1], [], []>} : vector<8x128xbf16>, vector<128x128xbf16>, vector<8x128xf32> -> vector<8x128xf32>
    %72 = arith.addf %68, %71 : vector<8x128xf32>
    %c0_53 = arith.constant 0 : index
    %c0_54 = arith.constant 0 : index
    %73 = vector.load %arg16[%c0_53, %c0_54] : memref<1x128xf32, #tpu.memory_space<vmem>>, vector<1x128xf32>
    %74 = vector.broadcast %73 : vector<1x128xf32> to vector<8x128xf32>
    %75 = arith.addf %72, %74 : vector<8x128xf32>
    %cst_55 = arith.constant 0.000000e+00 : f32
    %76 = vector.broadcast %cst_55 : f32 to vector<8x128xf32>
    %77 = arith.maximumf %75, %76 : vector<8x128xf32>
    %78 = arith.truncf %77 : vector<8x128xf32> to vector<8x128xbf16>
    %c0_56 = arith.constant 0 : index
    %c0_57 = arith.constant 0 : index
    %79 = vector.load %arg17[%c0_56, %c0_57] : memref<128x128xbf16, #tpu.memory_space<vmem>>, vector<128x128xbf16>
    %cst_58 = arith.constant dense<0.000000e+00> : vector<8x128xf32>
    %80 = tpu.matmul %78, %79, %cst_58 {dimension_numbers = #tpu.dot_dimension_numbers<[1], [0], [0], [1], [0, 0, 1, 1], [], []>} : vector<8x128xbf16>, vector<128x128xbf16>, vector<8x128xf32> -> vector<8x128xf32>
    %c0_59 = arith.constant 0 : index
    %c0_60 = arith.constant 0 : index
    %81 = vector.load %arg18[%c0_59, %c0_60] : memref<1x128xf32, #tpu.memory_space<vmem>>, vector<1x128xf32>
    %82 = vector.broadcast %81 : vector<1x128xf32> to vector<8x128xf32>
    %83 = arith.addf %80, %82 : vector<8x128xf32>
    %cst_61 = arith.constant 0.000000e+00 : f32
    %84 = vector.broadcast %cst_61 : f32 to vector<8x128xf32>
    %85 = arith.maximumf %83, %84 : vector<8x128xf32>
    %86 = arith.truncf %85 : vector<8x128xf32> to vector<8x128xbf16>
    %c0_62 = arith.constant 0 : index
    %c0_63 = arith.constant 0 : index
    %87 = vector.load %arg19[%c0_62, %c0_63] : memref<128x128xbf16, #tpu.memory_space<vmem>>, vector<128x128xbf16>
    %cst_64 = arith.constant dense<0.000000e+00> : vector<8x128xf32>
    %88 = tpu.matmul %86, %87, %cst_64 {dimension_numbers = #tpu.dot_dimension_numbers<[1], [0], [0], [1], [0, 0, 1, 1], [], []>} : vector<8x128xbf16>, vector<128x128xbf16>, vector<8x128xf32> -> vector<8x128xf32>
    %c0_65 = arith.constant 0 : index
    %c0_66 = arith.constant 0 : index
    %89 = vector.load %arg20[%c0_65, %c0_66] : memref<1x128xf32, #tpu.memory_space<vmem>>, vector<1x128xf32>
    %90 = vector.broadcast %89 : vector<1x128xf32> to vector<8x128xf32>
    %91 = arith.addf %88, %90 : vector<8x128xf32>
    %c0_67 = arith.constant 0 : index
    %c0_68 = arith.constant 0 : index
    %92 = vector.load %arg21[%c0_67, %c0_68] : memref<8x128xf32, #tpu.memory_space<vmem>>, vector<8x128xf32>
    tpu.vector_store %arg21[%c0_67, %c0_68], %91 {strides = array<i32>} : memref<8x128xf32, #tpu.memory_space<vmem>>, vector<8x128xf32>,
    return
  }
}

</mosaic_0001>

<llo_original>
// kernel: gin_forward.1
$region0: #{gin_forward.1}
  #allocation0 [shape = 'u32[]', space=smem, size = 0x4, offset = 0x4, fixed_abs, tag = 'smem constant byte address 0x4 - core index']
  #allocation1 [shape = 'u32[144,128]{1,0:T(1,128)}', space=vmem, size = 0x12000, scoped, tag = 'internal scratch']
  %s0 = inlined_call_operand.vmem [shape: bf16[128,128], index: 0, kind: input, shape index: {}]
  %s1 = inlined_call_operand.vmem [shape: bf16[128,128], index: 1, kind: input, shape index: {}]
  %s2 = inlined_call_operand.vmem [shape: bf16[8,128], index: 2, kind: input, shape index: {}]
  %s3 = inlined_call_operand.vmem [shape: bf16[128,128], index: 3, kind: input, shape index: {}]
  %s4 = inlined_call_operand.vmem [shape: f32[1,128], index: 4, kind: input, shape index: {}]
  %s5 = inlined_call_operand.vmem [shape: bf16[128,128], index: 5, kind: input, shape index: {}]
  %s6 = inlined_call_operand.vmem [shape: f32[1,128], index: 6, kind: input, shape index: {}]
  %s7 = inlined_call_operand.vmem [shape: bf16[128,128], index: 7, kind: input, shape index: {}]
  %s8 = inlined_call_operand.vmem [shape: f32[1,128], index: 8, kind: input, shape index: {}]
  %s9 = inlined_call_operand.vmem [shape: bf16[128,128], index: 9, kind: input, shape index: {}]
  %s10 = inlined_call_operand.vmem [shape: f32[1,128], index: 10, kind: input, shape index: {}]
  %s11 = inlined_call_operand.vmem [shape: bf16[128,128], index: 11, kind: input, shape index: {}]
  %s12 = inlined_call_operand.vmem [shape: f32[1,128], index: 12, kind: input, shape index: {}]
  %s13 = inlined_call_operand.vmem [shape: bf16[128,128], index: 13, kind: input, shape index: {}]
  %s14 = inlined_call_operand.vmem [shape: f32[1,128], index: 14, kind: input, shape index: {}]
  %s15 = inlined_call_operand.vmem [shape: bf16[384,128], index: 15, kind: input, shape index: {}]
  %s16 = inlined_call_operand.vmem [shape: f32[1,128], index: 16, kind: input, shape index: {}]
  %s17 = inlined_call_operand.vmem [shape: bf16[128,128], index: 17, kind: input, shape index: {}]
  %s18 = inlined_call_operand.vmem [shape: f32[1,128], index: 18, kind: input, shape index: {}]
  %s19 = inlined_call_operand.vmem [shape: bf16[128,128], index: 19, kind: input, shape index: {}]
  %s20 = inlined_call_operand.vmem [shape: f32[1,128], index: 20, kind: input, shape index: {}]
  %s21 = inlined_call_operand.vmem [shape: f32[8,128], index: 21, kind: output, shape index: {}]
  %s22 = sld [smem:[#allocation0]]
  $region94: #{gin_forward.1} parent=0
    _
  %s24 = ssub.s32 1, %s22
  %s25 = scalar_select 0, %s24, %s22
  // Predicated region
  $region2: #{gin_forward.1} parent=0 // pred_check
    _
  $region3: #{gin_forward.1} parent=0 // pred_check_branch
    %27 = sbr.rel (0) target = $region5
  $region4: #{gin_forward.1} parent=0 // pred_region
    _
  $region5: #{gin_forward.1} parent=0 // pred_fallthru
    _
  // Predicated region
  $region6: #{gin_forward.1} parent=0 // pred_check
    _
  $region7: #{gin_forward.1} parent=0 // pred_check_branch
    %29 = sbr.rel (0) target = $region9
  $region8: #{gin_forward.1} parent=0 // pred_region
    _
  $region9: #{gin_forward.1} parent=0 // pred_fallthru
    _
  // Predicated region
  $region10: #{gin_forward.1} parent=0 // pred_check
    _
  $region11: #{gin_forward.1} parent=0 // pred_check_branch
    %31 = sbr.rel (0) target = $region13
  $region12: #{gin_forward.1} parent=0 // pred_region
    _
  $region13: #{gin_forward.1} parent=0 // pred_fallthru
    _
  // Predicated region
  $region14: #{gin_forward.1} parent=0 // pred_check
    _
  $region15: #{gin_forward.1} parent=0 // pred_check_branch
    %33 = sbr.rel (0) target = $region17
  $region16: #{gin_forward.1} parent=0 // pred_region
    _
  $region17: #{gin_forward.1} parent=0 // pred_fallthru
    _
  // Predicated region
  $region18: #{gin_forward.1} parent=0 // pred_check
    _
  $region19: #{gin_forward.1} parent=0 // pred_check_branch
    %35 = sbr.rel (0) target = $region21
  $region20: #{gin_forward.1} parent=0 // pred_region
    _
  $region21: #{gin_forward.1} parent=0 // pred_fallthru
    _
  // Predicated region
  $region22: #{gin_forward.1} parent=0 // pred_check
    _
  $region23: #{gin_forward.1} parent=0 // pred_check_branch
    %37 = sbr.rel (0) target = $region25
  $region24: #{gin_forward.1} parent=0 // pred_region
    _
  $region25: #{gin_forward.1} parent=0 // pred_fallthru
    _
  // Predicated region
  $region26: #{gin_forward.1} parent=0 // pred_check
    _
  $region27: #{gin_forward.1} parent=0 // pred_check_branch
    %39 = sbr.rel (0) target = $region29
  $region28: #{gin_forward.1} parent=0 // pred_region
    _
  $region29: #{gin_forward.1} parent=0 // pred_fallthru
    _
  // Predicated region
  $region30: #{gin_forward.1} parent=0 // pred_check
    _
  $region31: #{gin_forward.1} parent=0 // pred_check_branch
    %41 = sbr.rel (0) target = $region33
  $region32: #{gin_forward.1} parent=0 // pred_region
    _
  $region33: #{gin_forward.1} parent=0 // pred_fallthru
    _
  // Predicated region
  $region34: #{gin_forward.1} parent=0 // pred_check
    _
  $region35: #{gin_forward.1} parent=0 // pred_check_branch
    %43 = sbr.rel (0) target = $region37
  $region36: #{gin_forward.1} parent=0 // pred_region
    _
  $region37: #{gin_forward.1} parent=0 // pred_fallthru
    _
  // Predicated region
  $region38: #{gin_forward.1} parent=0 // pred_check
    _
  $region39: #{gin_forward.1} parent=0 // pred_check_branch
    %45 = sbr.rel (0) target = $region41
  $region40: #{gin_forward.1} parent=0 // pred_region
    _
  $region41: #{gin_forward.1} parent=0 // pred_fallthru
    _
  // Predicated region
  $region42: #{gin_forward.1} parent=0 // pred_check
    _
  $region43: #{gin_forward.1} parent=0 // pred_check_branch
    %47 = sbr.rel (0) target = $region45
  $region44: #{gin_forward.1} parent=0 // pred_region
    _
  $region45: #{gin_forward.1} parent=0 // pred_fallthru
    _
  // Predicated region
  $region46: #{gin_forward.1} parent=0 // pred_check
    _
  $region47: #{gin_forward.1} parent=0 // pred_check_branch
    %49 = sbr.rel (0) target = $region49
  $region48: #{gin_forward.1} parent=0 // pred_region
    _
  $region49: #{gin_forward.1} parent=0 // pred_fallthru
    _
  // Predicated region
  $region50: #{gin_forward.1} parent=0 // pred_check
    _
  $region51: #{gin_forward.1} parent=0 // pred_check_branch
    %51 = sbr.rel (0) target = $region53
  $region52: #{gin_forward.1} parent=0 // pred_region
    _
  $region53: #{gin_forward.1} parent=0 // pred_fallthru
    _
  // Predicated region
  $region54: #{gin_forward.1} parent=0 // pred_check
    _
  $region55: #{gin_forward.1} parent=0 // pred_check_branch
    %53 = sbr.rel (0) target = $region57
  $region56: #{gin_forward.1} parent=0 // pred_region
    _
  $region57: #{gin_forward.1} parent=0 // pred_fallthru
    _
  // Predicated region
  $region58: #{gin_forward.1} parent=0 // pred_check
    _
  $region59: #{gin_forward.1} parent=0 // pred_check_branch
    %55 = sbr.rel (0) target = $region61
  $region60: #{gin_forward.1} parent=0 // pred_region
    _
  $region61: #{gin_forward.1} parent=0 // pred_fallthru
    _
  // Predicated region
  $region62: #{gin_forward.1} parent=0 // pred_check
    _
  $region63: #{gin_forward.1} parent=0 // pred_check_branch
    %57 = sbr.rel (0) target = $region65
  $region64: #{gin_forward.1} parent=0 // pred_region
    _
  $region65: #{gin_forward.1} parent=0 // pred_fallthru
    _
  // Predicated region
  $region66: #{gin_forward.1} parent=0 // pred_check
    _
  $region67: #{gin_forward.1} parent=0 // pred_check_branch
    %59 = sbr.rel (0) target = $region69
  $region68: #{gin_forward.1} parent=0 // pred_region
    _
  $region69: #{gin_forward.1} parent=0 // pred_fallthru
    _
  // Predicated region
  $region70: #{gin_forward.1} parent=0 // pred_check
    _
  $region71: #{gin_forward.1} parent=0 // pred_check_branch
    %61 = sbr.rel (0) target = $region73
  $region72: #{gin_forward.1} parent=0 // pred_region
    _
  $region73: #{gin_forward.1} parent=0 // pred_fallthru
    _
  // Predicated region
  $region74: #{gin_forward.1} parent=0 // pred_check
    _
  $region75: #{gin_forward.1} parent=0 // pred_check_branch
    %63 = sbr.rel (0) target = $region77
  $region76: #{gin_forward.1} parent=0 // pred_region
    _
  $region77: #{gin_forward.1} parent=0 // pred_fallthru
    _
  // Predicated region
  $region78: #{gin_forward.1} parent=0 // pred_check
    _
  $region79: #{gin_forward.1} parent=0 // pred_check_branch
    %65 = sbr.rel (0) target = $region81
  $region80: #{gin_forward.1} parent=0 // pred_region
    _
  $region81: #{gin_forward.1} parent=0 // pred_fallthru
    _
  // Predicated region
  $region82: #{gin_forward.1} parent=0 // pred_check
    _
  $region83: #{gin_forward.1} parent=0 // pred_check_branch
    %67 = sbr.rel (0) target = $region85
  $region84: #{gin_forward.1} parent=0 // pred_region
    _
  $region85: #{gin_forward.1} parent=0 // pred_fallthru
    _
  %v69 = vld [vmem:[%s0] sm:$0xf]
  %v70 = vld [vmem:[%s0 + $0x4] sm:$0xf]
  %v71 = vld [vmem:[%s0 + $0x8] sm:$0xf]
  %v72 = vld [vmem:[%s0 + $0xc] sm:$0xf]
  %v73 = vld [vmem:[%s0 + $0x10] sm:$0xf]
  %v74 = vld [vmem:[%s0 + $0x14] sm:$0xf]
  %v75 = vld [vmem:[%s0 + $0x18] sm:$0xf]
  %v76 = vld [vmem:[%s0 + $0x1c] sm:$0xf]
  %v77 = vld [vmem:[%s0 + $0x20] sm:$0xf]
  %v78 = vld [vmem:[%s0 + $0x24] sm:$0xf]
  %v79 = vld [vmem:[%s0 + $0x28] sm:$0xf]
  %v80 = vld [vmem:[%s0 + $0x2c] sm:$0xf]
  %v81 = vld [vmem:[%s0 + $0x30] sm:$0xf]
  %v82 = vld [vmem:[%s0 + $0x34] sm:$0xf]
  %v83 = vld [vmem:[%s0 + $0x38] sm:$0xf]
  %v84 = vld [vmem:[%s0 + $0x3c] sm:$0xf]
  %v85 = vld [vmem:[%s2] sm:$0xf]
  %v86 = vld [vmem:[%s1] sm:$0xf]
  %v87 = vld [vmem:[%s1 + $0x4] sm:$0xf]
  %v88 = vld [vmem:[%s1 + $0x8] sm:$0xf]
  %v89 = vld [vmem:[%s1 + $0xc] sm:$0xf]
  %v90 = vld [vmem:[%s1 + $0x10] sm:$0xf]
  %v91 = vld [vmem:[%s1 + $0x14] sm:$0xf]
  %v92 = vld [vmem:[%s1 + $0x18] sm:$0xf]
  %v93 = vld [vmem:[%s1 + $0x1c] sm:$0xf]
  %v94 = vld [vmem:[%s1 + $0x20] sm:$0xf]
  %v95 = vld [vmem:[%s1 + $0x24] sm:$0xf]
  %v96 = vld [vmem:[%s1 + $0x28] sm:$0xf]
  %v97 = vld [vmem:[%s1 + $0x2c] sm:$0xf]
  %v98 = vld [vmem:[%s1 + $0x30] sm:$0xf]
  %v99 = vld [vmem:[%s1 + $0x34] sm:$0xf]
  %v100 = vld [vmem:[%s1 + $0x38] sm:$0xf]
  %v101 = vld [vmem:[%s1 + $0x3c] sm:$0xf]
  %v118 = vunpack.c.l.b16 %v69
  %v119 = vunpack.c.l.b16 %v70
  %v120 = vunpack.c.l.b16 %v71
  %v121 = vunpack.c.l.b16 %v72
  %v122 = vunpack.c.l.b16 %v73
  %v123 = vunpack.c.l.b16 %v74
  %v124 = vunpack.c.l.b16 %v75
  %v125 = vunpack.c.l.b16 %v76
  %v126 = vunpack.c.l.b16 %v77
  %v127 = vunpack.c.l.b16 %v78
  %v128 = vunpack.c.l.b16 %v79
  %v129 = vunpack.c.l.b16 %v80
  %v130 = vunpack.c.l.b16 %v81
  %v131 = vunpack.c.l.b16 %v82
  %v132 = vunpack.c.l.b16 %v83
  %v133 = vunpack.c.l.b16 %v84
  %v134 = vpack.c.b16 %v119, %v118
  %v135 = vpack.c.b16 %v121, %v120
  %v136 = vpack.c.b16 %v123, %v122
  %v137 = vpack.c.b16 %v125, %v124
  %v138 = vpack.c.b16 %v127, %v126
  %v139 = vpack.c.b16 %v129, %v128
  %v140 = vpack.c.b16 %v131, %v130
  %v141 = vpack.c.b16 %v133, %v132
  %v166 = vunpack.c.l.b16 %v86
  %v167 = vunpack.c.l.b16 %v87
  %v168 = vunpack.c.l.b16 %v88
  %v169 = vunpack.c.l.b16 %v89
  %v170 = vunpack.c.l.b16 %v90
  %v171 = vunpack.c.l.b16 %v91
  %v172 = vunpack.c.l.b16 %v92
  %v173 = vunpack.c.l.b16 %v93
  %v174 = vunpack.c.l.b16 %v94
  %v175 = vunpack.c.l.b16 %v95
  %v176 = vunpack.c.l.b16 %v96
  %v177 = vunpack.c.l.b16 %v97
  %v178 = vunpack.c.l.b16 %v98
  %v179 = vunpack.c.l.b16 %v99
  %v180 = vunpack.c.l.b16 %v100
  %v181 = vunpack.c.l.b16 %v101
  %v182 = vpack.c.b16 %v167, %v166
  %v183 = vpack.c.b16 %v169, %v168
  %v184 = vpack.c.b16 %v171, %v170
  %v185 = vpack.c.b16 %v173, %v172
  %v186 = vpack.c.b16 %v175, %v174
  %v187 = vpack.c.b16 %v177, %v176
  %v188 = vpack.c.b16 %v179, %v178
  %v189 = vpack.c.b16 %v181, %v180
  %198 = vmatprep.subr.bf16.mxu0 0
  %199 = vmatpush1.bf16.msra.mxu0 %v189
  %200 = vmatprep.subr.bf16.mxu0 0
  %201 = vmatpush1.bf16.msra.mxu0 %v188
  %202 = vmatprep.subr.bf16.mxu0 0
  %203 = vmatpush1.bf16.msra.mxu0 %v187
  %204 = vmatprep.subr.bf16.mxu0 0
  %205 = vmatpush1.bf16.msra.mxu0 %v186
  %206 = vmatprep.subr.bf16.mxu0 0
  %207 = vmatpush1.bf16.msra.mxu0 %v185
  %208 = vmatprep.subr.bf16.mxu0 0
  %209 = vmatpush1.bf16.msra.mxu0 %v184
  %210 = vmatprep.subr.bf16.mxu0 0
  %211 = vmatpush1.bf16.msra.mxu0 %v183
  %212 = vmatprep.subr.bf16.mxu0 0
  %213 = vmatpush1.bf16.msra.mxu0 %v182
  %214 = vmatprep.subr.bf16.mxu0 0
  %215 = vmatpush2.bf16.msra.mxu0 0
  %216 = vmatprep.subr.bf16.mxu0 0
  %217 = vmatpush2.bf16.msra.mxu0 0
  %218 = vmatprep.subr.bf16.mxu0 0
  %219 = vmatpush2.bf16.msra.mxu0 0
  %220 = vmatprep.subr.bf16.mxu0 0
  %221 = vmatpush2.bf16.msra.mxu0 0
  %222 = vmatprep.subr.bf16.mxu0 0
  %223 = vmatpush2.bf16.msra.mxu0 0
  %224 = vmatprep.subr.bf16.mxu0 0
  %225 = vmatpush2.bf16.msra.mxu0 0
  %226 = vmatprep.subr.bf16.mxu0 0
  %227 = vmatpush2.bf16.msra.mxu0 0
  %228 = vmatprep.subr.bf16.mxu0 0
  %229 = vmatpush2.bf16.msra.mxu0 0
  %230 = vmatprep.mubr.bf16.mxu0 0
  %231 = vmatmul.mubr.bf16.gmra.mxu0 %v134
  %v232 = vpop.f32.mrf.mxu0
  %v233 = vadd.f32 0.0, %v232
  %v234 = vpop.f32.mrf.mxu0
  %v235 = vpop.f32.mrf.mxu0
  %v236 = vadd.f32 0.0, %v235
  %v237 = vpop.f32.mrf.mxu0
  %238 = vmatprep.mubr.bf16.mxu0 0
  %239 = vmatmul.mubr.bf16.gmra.mxu0 %v135
  %v240 = vpop.f32.mrf.mxu0
  %v241 = vadd.f32 0.0, %v240
  %v242 = vpop.f32.mrf.mxu0
  %v243 = vpop.f32.mrf.mxu0
  %v244 = vadd.f32 0.0, %v243
  %v245 = vpop.f32.mrf.mxu0
  %246 = vmatprep.mubr.bf16.mxu0 0
  %247 = vmatmul.mubr.bf16.gmra.mxu0 %v136
  %v248 = vpop.f32.mrf.mxu0
  %v249 = vadd.f32 0.0, %v248
  %v250 = vpop.f32.mrf.mxu0
  %v251 = vpop.f32.mrf.mxu0
  %v252 = vadd.f32 0.0, %v251
  %v253 = vpop.f32.mrf.mxu0
  %254 = vmatprep.mubr.bf16.mxu0 0
  %255 = vmatmul.mubr.bf16.gmra.mxu0 %v137
  %v256 = vpop.f32.mrf.mxu0
  %v257 = vadd.f32 0.0, %v256
  %v258 = vpop.f32.mrf.mxu0
  %v259 = vpop.f32.mrf.mxu0
  %v260 = vadd.f32 0.0, %v259
  %v261 = vpop.f32.mrf.mxu0
  %262 = vmatprep.mubr.bf16.mxu0 0
  %263 = vmatmul.mubr.bf16.gmra.mxu0 %v138
  %v264 = vpop.f32.mrf.mxu0
  %v265 = vadd.f32 0.0, %v264
  %v266 = vpop.f32.mrf.mxu0
  %v267 = vpop.f32.mrf.mxu0
  %v268 = vadd.f32 0.0, %v267
  %v269 = vpop.f32.mrf.mxu0
  %270 = vmatprep.mubr.bf16.mxu0 0
  %271 = vmatmul.mubr.bf16.gmra.mxu0 %v139
  %v272 = vpop.f32.mrf.mxu0
  %v273 = vadd.f32 0.0, %v272
  %v274 = vpop.f32.mrf.mxu0
  %v275 = vpop.f32.mrf.mxu0
  %v276 = vadd.f32 0.0, %v275
  %v277 = vpop.f32.mrf.mxu0
  %278 = vmatprep.mubr.bf16.mxu0 0
  %279 = vmatmul.mubr.bf16.gmra.mxu0 %v140
  %v280 = vpop.f32.mrf.mxu0
  %v281 = vadd.f32 0.0, %v280
  %v282 = vpop.f32.mrf.mxu0
  %v283 = vpop.f32.mrf.mxu0
  %v284 = vadd.f32 0.0, %v283
  %v285 = vpop.f32.mrf.mxu0
  %286 = vmatprep.mubr.bf16.mxu0 0
  %287 = vmatmul.mubr.bf16.gmra.mxu0 %v141
  %v288 = vpop.f32.mrf.mxu0
  %v289 = vadd.f32 0.0, %v288
  %v290 = vpop.f32.mrf.mxu0
  %v291 = vpop.f32.mrf.mxu0
  %v292 = vadd.f32 0.0, %v291
  %v293 = vpop.f32.mrf.mxu0
  %294 = vdwg.mxu0
  %v295 = vpack.c.bf16 %v236, %v233
  %v296 = vpack.c.bf16 %v244, %v241
  %v297 = vpack.c.bf16 %v252, %v249
  %v298 = vpack.c.bf16 %v260, %v257
  %v299 = vpack.c.bf16 %v268, %v265
  %v300 = vpack.c.bf16 %v276, %v273
  %v301 = vpack.c.bf16 %v284, %v281
  %v302 = vpack.c.bf16 %v292, %v289
  %v303 = vld [vmem:[%s3] sm:$0xf]
  %v304 = vld [vmem:[%s3 + $0x4] sm:$0xf]
  %v305 = vld [vmem:[%s3 + $0x8] sm:$0xf]
  %v306 = vld [vmem:[%s3 + $0xc] sm:$0xf]
  %v307 = vld [vmem:[%s3 + $0x10] sm:$0xf]
  %v308 = vld [vmem:[%s3 + $0x14] sm:$0xf]
  %v309 = vld [vmem:[%s3 + $0x18] sm:$0xf]
  %v310 = vld [vmem:[%s3 + $0x1c] sm:$0xf]
  %v311 = vld [vmem:[%s3 + $0x20] sm:$0xf]
  %v312 = vld [vmem:[%s3 + $0x24] sm:$0xf]
  %v313 = vld [vmem:[%s3 + $0x28] sm:$0xf]
  %v314 = vld [vmem:[%s3 + $0x2c] sm:$0xf]
  %v315 = vld [vmem:[%s3 + $0x30] sm:$0xf]
  %v316 = vld [vmem:[%s3 + $0x34] sm:$0xf]
  %v317 = vld [vmem:[%s3 + $0x38] sm:$0xf]
  %v318 = vld [vmem:[%s3 + $0x3c] sm:$0xf]
  %v319 = vld [vmem:[%s4] sm:$0x1]
  %v321 = vlaneseq
  %v322 = vshrl.u32 %v321, 7
  %v323 = vsub.s32 0, %v322
  %v324 = vrot.slane %v319, %v323
  %v342 = vunpack.c.l.b16 %v303
  %v343 = vunpack.c.l.b16 %v304
  %v344 = vunpack.c.l.b16 %v305
  %v345 = vunpack.c.l.b16 %v306
  %v346 = vunpack.c.l.b16 %v307
  %v347 = vunpack.c.l.b16 %v308
  %v348 = vunpack.c.l.b16 %v309
  %v349 = vunpack.c.l.b16 %v310
  %v350 = vunpack.c.l.b16 %v311
  %v351 = vunpack.c.l.b16 %v312
  %v352 = vunpack.c.l.b16 %v313
  %v353 = vunpack.c.l.b16 %v314
  %v354 = vunpack.c.l.b16 %v315
  %v355 = vunpack.c.l.b16 %v316
  %v356 = vunpack.c.l.b16 %v317
  %v357 = vunpack.c.l.b16 %v318
  %v358 = vpack.c.b16 %v343, %v342
  %v359 = vpack.c.b16 %v345, %v344
  %v360 = vpack.c.b16 %v347, %v346
  %v361 = vpack.c.b16 %v349, %v348
  %v362 = vpack.c.b16 %v351, %v350
  %v363 = vpack.c.b16 %v353, %v352
  %v364 = vpack.c.b16 %v355, %v354
  %v365 = vpack.c.b16 %v357, %v356
  %374 = vmatprep.subr.bf16.mxu0 0
  %375 = vmatpush1.bf16.msra.mxu0 %v365
  %376 = vmatprep.subr.bf16.mxu0 0
  %377 = vmatpush1.bf16.msra.mxu0 %v364
  %378 = vmatprep.subr.bf16.mxu0 0
  %379 = vmatpush1.bf16.msra.mxu0 %v363
  %380 = vmatprep.subr.bf16.mxu0 0
  %381 = vmatpush1.bf16.msra.mxu0 %v362
  %382 = vmatprep.subr.bf16.mxu0 0
  %383 = vmatpush1.bf16.msra.mxu0 %v361
  %384 = vmatprep.subr.bf16.mxu0 0
  %385 = vmatpush1.bf16.msra.mxu0 %v360
  %386 = vmatprep.subr.bf16.mxu0 0
  %387 = vmatpush1.bf16.msra.mxu0 %v359
  %388 = vmatprep.subr.bf16.mxu0 0
  %389 = vmatpush1.bf16.msra.mxu0 %v358
  %390 = vmatprep.subr.bf16.mxu0 0
  %391 = vmatpush2.bf16.msra.mxu0 0
  %392 = vmatprep.subr.bf16.mxu0 0
  %393 = vmatpush2.bf16.msra.mxu0 0
  %394 = vmatprep.subr.bf16.mxu0 0
  %395 = vmatpush2.bf16.msra.mxu0 0
  %396 = vmatprep.subr.bf16.mxu0 0
  %397 = vmatpush2.bf16.msra.mxu0 0
  %398 = vmatprep.subr.bf16.mxu0 0
  %399 = vmatpush2.bf16.msra.mxu0 0
  %400 = vmatprep.subr.bf16.mxu0 0
  %401 = vmatpush2.bf16.msra.mxu0 0
  %402 = vmatprep.subr.bf16.mxu0 0
  %403 = vmatpush2.bf16.msra.mxu0 0
  %404 = vmatprep.subr.bf16.mxu0 0
  %405 = vmatpush2.bf16.msra.mxu0 0
  %406 = vmatprep.mubr.bf16.mxu0 0
  %407 = vmatmul.mubr.bf16.gmra.mxu0 %v295
  %v408 = vpop.f32.mrf.mxu0
  %v409 = vadd.f32 %v324, %v408
  %v410 = vpop.f32.mrf.mxu0
  %v411 = vpop.f32.mrf.mxu0
  %v412 = vadd.f32 %v324, %v411
  %v413 = vpop.f32.mrf.mxu0
  %414 = vmatprep.mubr.bf16.mxu0 0
  %415 = vmatmul.mubr.bf16.gmra.mxu0 %v296
  %v416 = vpop.f32.mrf.mxu0
  %v417 = vadd.f32 %v324, %v416
  %v418 = vpop.f32.mrf.mxu0
  %v419 = vpop.f32.mrf.mxu0
  %v420 = vadd.f32 %v324, %v419
  %v421 = vpop.f32.mrf.mxu0
  %422 = vmatprep.mubr.bf16.mxu0 0
  %423 = vmatmul.mubr.bf16.gmra.mxu0 %v297
  %v424 = vpop.f32.mrf.mxu0
  %v425 = vadd.f32 %v324, %v424
  %v426 = vpop.f32.mrf.mxu0
  %v427 = vpop.f32.mrf.mxu0
  %v428 = vadd.f32 %v324, %v427
  %v429 = vpop.f32.mrf.mxu0
  %430 = vmatprep.mubr.bf16.mxu0 0
  %431 = vmatmul.mubr.bf16.gmra.mxu0 %v298
  %v432 = vpop.f32.mrf.mxu0
  %v433 = vadd.f32 %v324, %v432
  %v434 = vpop.f32.mrf.mxu0
  %v435 = vpop.f32.mrf.mxu0
  %v436 = vadd.f32 %v324, %v435
  %v437 = vpop.f32.mrf.mxu0
  %438 = vmatprep.mubr.bf16.mxu0 0
  %439 = vmatmul.mubr.bf16.gmra.mxu0 %v299
  %v440 = vpop.f32.mrf.mxu0
  %v441 = vadd.f32 %v324, %v440
  %v442 = vpop.f32.mrf.mxu0
  %v443 = vpop.f32.mrf.mxu0
  %v444 = vadd.f32 %v324, %v443
  %v445 = vpop.f32.mrf.mxu0
  %446 = vmatprep.mubr.bf16.mxu0 0
  %447 = vmatmul.mubr.bf16.gmra.mxu0 %v300
  %v448 = vpop.f32.mrf.mxu0
  %v449 = vadd.f32 %v324, %v448
  %v450 = vpop.f32.mrf.mxu0
  %v451 = vpop.f32.mrf.mxu0
  %v452 = vadd.f32 %v324, %v451
  %v453 = vpop.f32.mrf.mxu0
  %454 = vmatprep.mubr.bf16.mxu0 0
  %455 = vmatmul.mubr.bf16.gmra.mxu0 %v301
  %v456 = vpop.f32.mrf.mxu0
  %v457 = vadd.f32 %v324, %v456
  %v458 = vpop.f32.mrf.mxu0
  %v459 = vpop.f32.mrf.mxu0
  %v460 = vadd.f32 %v324, %v459
  %v461 = vpop.f32.mrf.mxu0
  %462 = vmatprep.mubr.bf16.mxu0 0
  %463 = vmatmul.mubr.bf16.gmra.mxu0 %v302
  %v464 = vpop.f32.mrf.mxu0
  %v465 = vadd.f32 %v324, %v464
  %v466 = vpop.f32.mrf.mxu0
  %v467 = vpop.f32.mrf.mxu0
  %v468 = vadd.f32 %v324, %v467
  %v469 = vpop.f32.mrf.mxu0
  %470 = vdwg.mxu0
  %v471 = vmax.f32 %v409, 0.0
  %v472 = vmax.f32 %v412, 0.0
  %v473 = vmax.f32 %v417, 0.0
  %v474 = vmax.f32 %v420, 0.0
  %v475 = vmax.f32 %v425, 0.0
  %v476 = vmax.f32 %v428, 0.0
  %v477 = vmax.f32 %v433, 0.0
  %v478 = vmax.f32 %v436, 0.0
  %v479 = vmax.f32 %v441, 0.0
  %v480 = vmax.f32 %v444, 0.0
  %v481 = vmax.f32 %v449, 0.0
  %v482 = vmax.f32 %v452, 0.0
  %v483 = vmax.f32 %v457, 0.0
  %v484 = vmax.f32 %v460, 0.0
  %v485 = vmax.f32 %v465, 0.0
  %v486 = vmax.f32 %v468, 0.0
  %v487 = vpack.c.bf16 %v472, %v471
  %v488 = vpack.c.bf16 %v474, %v473
  %v489 = vpack.c.bf16 %v476, %v475
  %v490 = vpack.c.bf16 %v478, %v477
  %v491 = vpack.c.bf16 %v480, %v479
  %v492 = vpack.c.bf16 %v482, %v481
  %v493 = vpack.c.bf16 %v484, %v483
  %v494 = vpack.c.bf16 %v486, %v485
  %v495 = vld [vmem:[%s5] sm:$0xf]
  %v496 = vld [vmem:[%s5 + $0x4] sm:$0xf]
  %v497 = vld [vmem:[%s5 + $0x8] sm:$0xf]
  %v498 = vld [vmem:[%s5 + $0xc] sm:$0xf]
  %v499 = vld [vmem:[%s5 + $0x10] sm:$0xf]
  %v500 = vld [vmem:[%s5 + $0x14] sm:$0xf]
  %v501 = vld [vmem:[%s5 + $0x18] sm:$0xf]
  %v502 = vld [vmem:[%s5 + $0x1c] sm:$0xf]
  %v503 = vld [vmem:[%s5 + $0x20] sm:$0xf]
  %v504 = vld [vmem:[%s5 + $0x24] sm:$0xf]
  %v505 = vld [vmem:[%s5 + $0x28] sm:$0xf]
  %v506 = vld [vmem:[%s5 + $0x2c] sm:$0xf]
  %v507 = vld [vmem:[%s5 + $0x30] sm:$0xf]
  %v508 = vld [vmem:[%s5 + $0x34] sm:$0xf]
  %v509 = vld [vmem:[%s5 + $0x38] sm:$0xf]
  %v510 = vld [vmem:[%s5 + $0x3c] sm:$0xf]
  %v511 = vld [vmem:[%s6] sm:$0x1]
  %v513 = vlaneseq
  %v514 = vshrl.u32 %v513, 7
  %v515 = vsub.s32 0, %v514
  %v516 = vrot.slane %v511, %v515
  %v534 = vunpack.c.l.b16 %v495
  %v535 = vunpack.c.l.b16 %v496
  %v536 = vunpack.c.l.b16 %v497
  %v537 = vunpack.c.l.b16 %v498
  %v538 = vunpack.c.l.b16 %v499
  %v539 = vunpack.c.l.b16 %v500
  %v540 = vunpack.c.l.b16 %v501
  %v541 = vunpack.c.l.b16 %v502
  %v542 = vunpack.c.l.b16 %v503
  %v543 = vunpack.c.l.b16 %v504
  %v544 = vunpack.c.l.b16 %v505
  %v545 = vunpack.c.l.b16 %v506
  %v546 = vunpack.c.l.b16 %v507
  %v547 = vunpack.c.l.b16 %v508
  %v548 = vunpack.c.l.b16 %v509
  %v549 = vunpack.c.l.b16 %v510
  %v550 = vpack.c.b16 %v535, %v534
  %v551 = vpack.c.b16 %v537, %v536
  %v552 = vpack.c.b16 %v539, %v538
  %v553 = vpack.c.b16 %v541, %v540
  %v554 = vpack.c.b16 %v543, %v542
  %v555 = vpack.c.b16 %v545, %v544
  %v556 = vpack.c.b16 %v547, %v546
  %v557 = vpack.c.b16 %v549, %v548
  %566 = vmatprep.subr.bf16.mxu0 0
  %567 = vmatpush1.bf16.msra.mxu0 %v557
  %568 = vmatprep.subr.bf16.mxu0 0
  %569 = vmatpush1.bf16.msra.mxu0 %v556
  %570 = vmatprep.subr.bf16.mxu0 0
  %571 = vmatpush1.bf16.msra.mxu0 %v555
  %572 = vmatprep.subr.bf16.mxu0 0
  %573 = vmatpush1.bf16.msra.mxu0 %v554
  %574 = vmatprep.subr.bf16.mxu0 0
  %575 = vmatpush1.bf16.msra.mxu0 %v553
  %576 = vmatprep.subr.bf16.mxu0 0
  %577 = vmatpush1.bf16.msra.mxu0 %v552
  %578 = vmatprep.subr.bf16.mxu0 0
  %579 = vmatpush1.bf16.msra.mxu0 %v551
  %580 = vmatprep.subr.bf16.mxu0 0
  %581 = vmatpush1.bf16.msra.mxu0 %v550
  %582 = vmatprep.subr.bf16.mxu0 0
  %583 = vmatpush2.bf16.msra.mxu0 0
  %584 = vmatprep.subr.bf16.mxu0 0
  %585 = vmatpush2.bf16.msra.mxu0 0
  %586 = vmatprep.subr.bf16.mxu0 0
  %587 = vmatpush2.bf16.msra.mxu0 0
  %588 = vmatprep.subr.bf16.mxu0 0
  %589 = vmatpush2.bf16.msra.mxu0 0
  %590 = vmatprep.subr.bf16.mxu0 0
  %591 = vmatpush2.bf16.msra.mxu0 0
  %592 = vmatprep.subr.bf16.mxu0 0
  %593 = vmatpush2.bf16.msra.mxu0 0
  %594 = vmatprep.subr.bf16.mxu0 0
  %595 = vmatpush2.bf16.msra.mxu0 0
  %596 = vmatprep.subr.bf16.mxu0 0
  %597 = vmatpush2.bf16.msra.mxu0 0
  %598 = vmatprep.mubr.bf16.mxu0 0
  %599 = vmatmul.mubr.bf16.gmra.mxu0 %v487
  %v600 = vpop.f32.mrf.mxu0
  %v601 = vadd.f32 %v516, %v600
  %v602 = vpop.f32.mrf.mxu0
  %v603 = vpop.f32.mrf.mxu0
  %v604 = vadd.f32 %v516, %v603
  %v605 = vpop.f32.mrf.mxu0
  %606 = vmatprep.mubr.bf16.mxu0 0
  %607 = vmatmul.mubr.bf16.gmra.mxu0 %v488
  %v608 = vpop.f32.mrf.mxu0
  %v609 = vadd.f32 %v516, %v608
  %v610 = vpop.f32.mrf.mxu0
  %v611 = vpop.f32.mrf.mxu0
  %v612 = vadd.f32 %v516, %v611
  %v613 = vpop.f32.mrf.mxu0
  %614 = vmatprep.mubr.bf16.mxu0 0
  %615 = vmatmul.mubr.bf16.gmra.mxu0 %v489
  %v616 = vpop.f32.mrf.mxu0
  %v617 = vadd.f32 %v516, %v616
  %v618 = vpop.f32.mrf.mxu0
  %v619 = vpop.f32.mrf.mxu0
  %v620 = vadd.f32 %v516, %v619
  %v621 = vpop.f32.mrf.mxu0
  %622 = vmatprep.mubr.bf16.mxu0 0
  %623 = vmatmul.mubr.bf16.gmra.mxu0 %v490
  %v624 = vpop.f32.mrf.mxu0
  %v625 = vadd.f32 %v516, %v624
  %v626 = vpop.f32.mrf.mxu0
  %v627 = vpop.f32.mrf.mxu0
  %v628 = vadd.f32 %v516, %v627
  %v629 = vpop.f32.mrf.mxu0
  %630 = vmatprep.mubr.bf16.mxu0 0
  %631 = vmatmul.mubr.bf16.gmra.mxu0 %v491
  %v632 = vpop.f32.mrf.mxu0
  %v633 = vadd.f32 %v516, %v632
  %v634 = vpop.f32.mrf.mxu0
  %v635 = vpop.f32.mrf.mxu0
  %v636 = vadd.f32 %v516, %v635
  %v637 = vpop.f32.mrf.mxu0
  %638 = vmatprep.mubr.bf16.mxu0 0
  %639 = vmatmul.mubr.bf16.gmra.mxu0 %v492
  %v640 = vpop.f32.mrf.mxu0
  %v641 = vadd.f32 %v516, %v640
  %v642 = vpop.f32.mrf.mxu0
  %v643 = vpop.f32.mrf.mxu0
  %v644 = vadd.f32 %v516, %v643
  %v645 = vpop.f32.mrf.mxu0
  %646 = vmatprep.mubr.bf16.mxu0 0
  %647 = vmatmul.mubr.bf16.gmra.mxu0 %v493
  %v648 = vpop.f32.mrf.mxu0
  %v649 = vadd.f32 %v516, %v648
  %v650 = vpop.f32.mrf.mxu0
  %v651 = vpop.f32.mrf.mxu0
  %v652 = vadd.f32 %v516, %v651
  %v653 = vpop.f32.mrf.mxu0
  %654 = vmatprep.mubr.bf16.mxu0 0
  %655 = vmatmul.mubr.bf16.gmra.mxu0 %v494
  %v656 = vpop.f32.mrf.mxu0
  %v657 = vadd.f32 %v516, %v656
  %v658 = vpop.f32.mrf.mxu0
  %v659 = vpop.f32.mrf.mxu0
  %v660 = vadd.f32 %v516, %v659
  %v661 = vpop.f32.mrf.mxu0
  %662 = vdwg.mxu0
  %v663 = vmax.f32 %v601, 0.0
  %v664 = vmax.f32 %v604, 0.0
  %v665 = vmax.f32 %v609, 0.0
  %v666 = vmax.f32 %v612, 0.0
  %v667 = vmax.f32 %v617, 0.0
  %v668 = vmax.f32 %v620, 0.0
  %v669 = vmax.f32 %v625, 0.0
  %v670 = vmax.f32 %v628, 0.0
  %v671 = vmax.f32 %v633, 0.0
  %v672 = vmax.f32 %v636, 0.0
  %v673 = vmax.f32 %v641, 0.0
  %v674 = vmax.f32 %v644, 0.0
  %v675 = vmax.f32 %v649, 0.0
  %v676 = vmax.f32 %v652, 0.0
  %v677 = vmax.f32 %v657, 0.0
  %v678 = vmax.f32 %v660, 0.0
  %v679 = vpack.c.bf16 %v664, %v663
  %v680 = vpack.c.bf16 %v666, %v665
  %v681 = vpack.c.bf16 %v668, %v667
  %v682 = vpack.c.bf16 %v670, %v669
  %v683 = vpack.c.bf16 %v672, %v671
  %v684 = vpack.c.bf16 %v674, %v673
  %v685 = vpack.c.bf16 %v676, %v675
  %v686 = vpack.c.bf16 %v678, %v677
  %687 = vmatprep.subr.bf16.mxu0 0
  %688 = vmatpush1.bf16.msra.mxu0 %v686
  %689 = vmatprep.subr.bf16.mxu0 0
  %690 = vmatpush1.bf16.msra.mxu0 %v685
  %691 = vmatprep.subr.bf16.mxu0 0
  %692 = vmatpush1.bf16.msra.mxu0 %v684
  %693 = vmatprep.subr.bf16.mxu0 0
  %694 = vmatpush1.bf16.msra.mxu0 %v683
  %695 = vmatprep.subr.bf16.mxu0 0
  %696 = vmatpush1.bf16.msra.mxu0 %v682
  %697 = vmatprep.subr.bf16.mxu0 0
  %698 = vmatpush1.bf16.msra.mxu0 %v681
  %699 = vmatprep.subr.bf16.mxu0 0
  %700 = vmatpush1.bf16.msra.mxu0 %v680
  %701 = vmatprep.subr.bf16.mxu0 0
  %702 = vmatpush1.bf16.msra.mxu0 %v679
  %703 = vmatprep.subr.bf16.mxu0 0
  %704 = vmatpush2.bf16.msra.mxu0 0
  %705 = vmatprep.subr.bf16.mxu0 0
  %706 = vmatpush2.bf16.msra.mxu0 0
  %707 = vmatprep.subr.bf16.mxu0 0
  %708 = vmatpush2.bf16.msra.mxu0 0
  %709 = vmatprep.subr.bf16.mxu0 0
  %710 = vmatpush2.bf16.msra.mxu0 0
  %711 = vmatprep.subr.bf16.mxu0 0
  %712 = vmatpush2.bf16.msra.mxu0 0
  %713 = vmatprep.subr.bf16.mxu0 0
  %714 = vmatpush2.bf16.msra.mxu0 0
  %715 = vmatprep.subr.bf16.mxu0 0
  %716 = vmatpush2.bf16.msra.mxu0 0
  %717 = vmatprep.subr.bf16.mxu0 0
  %718 = vmatpush2.bf16.msra.mxu0 0
  %719 = vmatprep.mubr.bf16.mxu0 0
  %720 = vmatmul.mubr.bf16.gmra.mxu0 %v134
  %v721 = vpop.f32.mrf.mxu0
  %v722 = vadd.f32 0.0, %v721
  %v723 = vpop.f32.mrf.mxu0
  %v724 = vpop.f32.mrf.mxu0
  %v725 = vadd.f32 0.0, %v724
  %v726 = vpop.f32.mrf.mxu0
  %727 = vmatprep.mubr.bf16.mxu0 0
  %728 = vmatmul.mubr.bf16.gmra.mxu0 %v135
  %v729 = vpop.f32.mrf.mxu0
  %v730 = vadd.f32 0.0, %v729
  %v731 = vpop.f32.mrf.mxu0
  %v732 = vpop.f32.mrf.mxu0
  %v733 = vadd.f32 0.0, %v732
  %v734 = vpop.f32.mrf.mxu0
  %735 = vmatprep.mubr.bf16.mxu0 0
  %736 = vmatmul.mubr.bf16.gmra.mxu0 %v136
  %v737 = vpop.f32.mrf.mxu0
  %v738 = vadd.f32 0.0, %v737
  %v739 = vpop.f32.mrf.mxu0
  %v740 = vpop.f32.mrf.mxu0
  %v741 = vadd.f32 0.0, %v740
  %v742 = vpop.f32.mrf.mxu0
  %743 = vmatprep.mubr.bf16.mxu0 0
  %744 = vmatmul.mubr.bf16.gmra.mxu0 %v137
  %v745 = vpop.f32.mrf.mxu0
  %v746 = vadd.f32 0.0, %v745
  %v747 = vpop.f32.mrf.mxu0
  %v748 = vpop.f32.mrf.mxu0
  %v749 = vadd.f32 0.0, %v748
  %v750 = vpop.f32.mrf.mxu0
  %751 = vmatprep.mubr.bf16.mxu0 0
  %752 = vmatmul.mubr.bf16.gmra.mxu0 %v138
  %v753 = vpop.f32.mrf.mxu0
  %v754 = vadd.f32 0.0, %v753
  %v755 = vpop.f32.mrf.mxu0
  %v756 = vpop.f32.mrf.mxu0
  %v757 = vadd.f32 0.0, %v756
  %v758 = vpop.f32.mrf.mxu0
  %759 = vmatprep.mubr.bf16.mxu0 0
  %760 = vmatmul.mubr.bf16.gmra.mxu0 %v139
  %v761 = vpop.f32.mrf.mxu0
  %v762 = vadd.f32 0.0, %v761
  %v763 = vpop.f32.mrf.mxu0
  %v764 = vpop.f32.mrf.mxu0
  %v765 = vadd.f32 0.0, %v764
  %v766 = vpop.f32.mrf.mxu0
  %767 = vmatprep.mubr.bf16.mxu0 0
  %768 = vmatmul.mubr.bf16.gmra.mxu0 %v140
  %v769 = vpop.f32.mrf.mxu0
  %v770 = vadd.f32 0.0, %v769
  %v771 = vpop.f32.mrf.mxu0
  %v772 = vpop.f32.mrf.mxu0
  %v773 = vadd.f32 0.0, %v772
  %v774 = vpop.f32.mrf.mxu0
  %775 = vmatprep.mubr.bf16.mxu0 0
  %776 = vmatmul.mubr.bf16.gmra.mxu0 %v141
  %v777 = vpop.f32.mrf.mxu0
  %v778 = vadd.f32 0.0, %v777
  %v779 = vpop.f32.mrf.mxu0
  %v780 = vpop.f32.mrf.mxu0
  %v781 = vadd.f32 0.0, %v780
  %v782 = vpop.f32.mrf.mxu0
  %783 = vdwg.mxu0
  %v784 = vpack.c.bf16 %v725, %v722
  %v785 = vpack.c.bf16 %v733, %v730
  %v786 = vpack.c.bf16 %v741, %v738
  %v787 = vpack.c.bf16 %v749, %v746
  %v788 = vpack.c.bf16 %v757, %v754
  %v789 = vpack.c.bf16 %v765, %v762
  %v790 = vpack.c.bf16 %v773, %v770
  %v791 = vpack.c.bf16 %v781, %v778
  %v792 = vld [vmem:[%s7] sm:$0xf]
  %v793 = vld [vmem:[%s7 + $0x4] sm:$0xf]
  %v794 = vld [vmem:[%s7 + $0x8] sm:$0xf]
  %v795 = vld [vmem:[%s7 + $0xc] sm:$0xf]
  %v796 = vld [vmem:[%s7 + $0x10] sm:$0xf]
  %v797 = vld [vmem:[%s7 + $0x14] sm:$0xf]
  %v798 = vld [vmem:[%s7 + $0x18] sm:$0xf]
  %v799 = vld [vmem:[%s7 + $0x1c] sm:$0xf]
  %v800 = vld [vmem:[%s7 + $0x20] sm:$0xf]
  %v801 = vld [vmem:[%s7 + $0x24] sm:$0xf]
  %v802 = vld [vmem:[%s7 + $0x28] sm:$0xf]
  %v803 = vld [vmem:[%s7 + $0x2c] sm:$0xf]
  %v804 = vld [vmem:[%s7 + $0x30] sm:$0xf]
  %v805 = vld [vmem:[%s7 + $0x34] sm:$0xf]
  %v806 = vld [vmem:[%s7 + $0x38] sm:$0xf]
  %v807 = vld [vmem:[%s7 + $0x3c] sm:$0xf]
  %v808 = vld [vmem:[%s8] sm:$0x1]
  %v810 = vlaneseq
  %v811 = vshrl.u32 %v810, 7
  %v812 = vsub.s32 0, %v811
  %v813 = vrot.slane %v808, %v812
  %v831 = vunpack.c.l.b16 %v792
  %v832 = vunpack.c.l.b16 %v793
  %v833 = vunpack.c.l.b16 %v794
  %v834 = vunpack.c.l.b16 %v795
  %v835 = vunpack.c.l.b16 %v796
  %v836 = vunpack.c.l.b16 %v797
  %v837 = vunpack.c.l.b16 %v798
  %v838 = vunpack.c.l.b16 %v799
  %v839 = vunpack.c.l.b16 %v800
  %v840 = vunpack.c.l.b16 %v801
  %v841 = vunpack.c.l.b16 %v802
  %v842 = vunpack.c.l.b16 %v803
  %v843 = vunpack.c.l.b16 %v804
  %v844 = vunpack.c.l.b16 %v805
  %v845 = vunpack.c.l.b16 %v806
  %v846 = vunpack.c.l.b16 %v807
  %v847 = vpack.c.b16 %v832, %v831
  %v848 = vpack.c.b16 %v834, %v833
  %v849 = vpack.c.b16 %v836, %v835
  %v850 = vpack.c.b16 %v838, %v837
  %v851 = vpack.c.b16 %v840, %v839
  %v852 = vpack.c.b16 %v842, %v841
  %v853 = vpack.c.b16 %v844, %v843
  %v854 = vpack.c.b16 %v846, %v845
  %863 = vmatprep.subr.bf16.mxu0 0
  %864 = vmatpush1.bf16.msra.mxu0 %v854
  %865 = vmatprep.subr.bf16.mxu0 0
  %866 = vmatpush1.bf16.msra.mxu0 %v853
  %867 = vmatprep.subr.bf16.mxu0 0
  %868 = vmatpush1.bf16.msra.mxu0 %v852
  %869 = vmatprep.subr.bf16.mxu0 0
  %870 = vmatpush1.bf16.msra.mxu0 %v851
  %871 = vmatprep.subr.bf16.mxu0 0
  %872 = vmatpush1.bf16.msra.mxu0 %v850
  %873 = vmatprep.subr.bf16.mxu0 0
  %874 = vmatpush1.bf16.msra.mxu0 %v849
  %875 = vmatprep.subr.bf16.mxu0 0
  %876 = vmatpush1.bf16.msra.mxu0 %v848
  %877 = vmatprep.subr.bf16.mxu0 0
  %878 = vmatpush1.bf16.msra.mxu0 %v847
  %879 = vmatprep.subr.bf16.mxu0 0
  %880 = vmatpush2.bf16.msra.mxu0 0
  %881 = vmatprep.subr.bf16.mxu0 0
  %882 = vmatpush2.bf16.msra.mxu0 0
  %883 = vmatprep.subr.bf16.mxu0 0
  %884 = vmatpush2.bf16.msra.mxu0 0
  %885 = vmatprep.subr.bf16.mxu0 0
  %886 = vmatpush2.bf16.msra.mxu0 0
  %887 = vmatprep.subr.bf16.mxu0 0
  %888 = vmatpush2.bf16.msra.mxu0 0
  %889 = vmatprep.subr.bf16.mxu0 0
  %890 = vmatpush2.bf16.msra.mxu0 0
  %891 = vmatprep.subr.bf16.mxu0 0
  %892 = vmatpush2.bf16.msra.mxu0 0
  %893 = vmatprep.subr.bf16.mxu0 0
  %894 = vmatpush2.bf16.msra.mxu0 0
  %895 = vmatprep.mubr.bf16.mxu0 0
  %896 = vmatmul.mubr.bf16.gmra.mxu0 %v784
  %v897 = vpop.f32.mrf.mxu0
  %v898 = vadd.f32 %v813, %v897
  %v899 = vpop.f32.mrf.mxu0
  %v900 = vpop.f32.mrf.mxu0
  %v901 = vadd.f32 %v813, %v900
  %v902 = vpop.f32.mrf.mxu0
  %903 = vmatprep.mubr.bf16.mxu0 0
  %904 = vmatmul.mubr.bf16.gmra.mxu0 %v785
  %v905 = vpop.f32.mrf.mxu0
  %v906 = vadd.f32 %v813, %v905
  %v907 = vpop.f32.mrf.mxu0
  %v908 = vpop.f32.mrf.mxu0
  %v909 = vadd.f32 %v813, %v908
  %v910 = vpop.f32.mrf.mxu0
  %911 = vmatprep.mubr.bf16.mxu0 0
  %912 = vmatmul.mubr.bf16.gmra.mxu0 %v786
  %v913 = vpop.f32.mrf.mxu0
  %v914 = vadd.f32 %v813, %v913
  %v915 = vpop.f32.mrf.mxu0
  %v916 = vpop.f32.mrf.mxu0
  %v917 = vadd.f32 %v813, %v916
  %v918 = vpop.f32.mrf.mxu0
  %919 = vmatprep.mubr.bf16.mxu0 0
  %920 = vmatmul.mubr.bf16.gmra.mxu0 %v787
  %v921 = vpop.f32.mrf.mxu0
  %v922 = vadd.f32 %v813, %v921
  %v923 = vpop.f32.mrf.mxu0
  %v924 = vpop.f32.mrf.mxu0
  %v925 = vadd.f32 %v813, %v924
  %v926 = vpop.f32.mrf.mxu0
  %927 = vmatprep.mubr.bf16.mxu0 0
  %928 = vmatmul.mubr.bf16.gmra.mxu0 %v788
  %v929 = vpop.f32.mrf.mxu0
  %v930 = vadd.f32 %v813, %v929
  %v931 = vpop.f32.mrf.mxu0
  %v932 = vpop.f32.mrf.mxu0
  %v933 = vadd.f32 %v813, %v932
  %v934 = vpop.f32.mrf.mxu0
  %935 = vmatprep.mubr.bf16.mxu0 0
  %936 = vmatmul.mubr.bf16.gmra.mxu0 %v789
  %v937 = vpop.f32.mrf.mxu0
  %v938 = vadd.f32 %v813, %v937
  %v939 = vpop.f32.mrf.mxu0
  %v940 = vpop.f32.mrf.mxu0
  %v941 = vadd.f32 %v813, %v940
  %v942 = vpop.f32.mrf.mxu0
  %943 = vmatprep.mubr.bf16.mxu0 0
  %944 = vmatmul.mubr.bf16.gmra.mxu0 %v790
  %v945 = vpop.f32.mrf.mxu0
  %v946 = vadd.f32 %v813, %v945
  %v947 = vpop.f32.mrf.mxu0
  %v948 = vpop.f32.mrf.mxu0
  %v949 = vadd.f32 %v813, %v948
  %v950 = vpop.f32.mrf.mxu0
  %951 = vmatprep.mubr.bf16.mxu0 0
  %952 = vmatmul.mubr.bf16.gmra.mxu0 %v791
  %v953 = vpop.f32.mrf.mxu0
  %v954 = vadd.f32 %v813, %v953
  %v955 = vpop.f32.mrf.mxu0
  %v956 = vpop.f32.mrf.mxu0
  %v957 = vadd.f32 %v813, %v956
  %v958 = vpop.f32.mrf.mxu0
  %959 = vdwg.mxu0
  %v960 = vmax.f32 %v898, 0.0
  %v961 = vmax.f32 %v901, 0.0
  %v962 = vmax.f32 %v906, 0.0
  %v963 = vmax.f32 %v909, 0.0
  %v964 = vmax.f32 %v914, 0.0
  %v965 = vmax.f32 %v917, 0.0
  %v966 = vmax.f32 %v922, 0.0
  %v967 = vmax.f32 %v925, 0.0
  %v968 = vmax.f32 %v930, 0.0
  %v969 = vmax.f32 %v933, 0.0
  %v970 = vmax.f32 %v938, 0.0
  %v971 = vmax.f32 %v941, 0.0
  %v972 = vmax.f32 %v946, 0.0
  %v973 = vmax.f32 %v949, 0.0
  %v974 = vmax.f32 %v954, 0.0
  %v975 = vmax.f32 %v957, 0.0
  %v976 = vpack.c.bf16 %v961, %v960
  %v977 = vpack.c.bf16 %v963, %v962
  %v978 = vpack.c.bf16 %v965, %v964
  %v979 = vpack.c.bf16 %v967, %v966
  %v980 = vpack.c.bf16 %v969, %v968
  %v981 = vpack.c.bf16 %v971, %v970
  %v982 = vpack.c.bf16 %v973, %v972
  %v983 = vpack.c.bf16 %v975, %v974
  %v984 = vld [vmem:[%s9] sm:$0xf]
  %v985 = vld [vmem:[%s9 + $0x4] sm:$0xf]
  %v986 = vld [vmem:[%s9 + $0x8] sm:$0xf]
  %v987 = vld [vmem:[%s9 + $0xc] sm:$0xf]
  %v988 = vld [vmem:[%s9 + $0x10] sm:$0xf]
  %v989 = vld [vmem:[%s9 + $0x14] sm:$0xf]
  %v990 = vld [vmem:[%s9 + $0x18] sm:$0xf]
  %v991 = vld [vmem:[%s9 + $0x1c] sm:$0xf]
  %v992 = vld [vmem:[%s9 + $0x20] sm:$0xf]
  %v993 = vld [vmem:[%s9 + $0x24] sm:$0xf]
  %v994 = vld [vmem:[%s9 + $0x28] sm:$0xf]
  %v995 = vld [vmem:[%s9 + $0x2c] sm:$0xf]
  %v996 = vld [vmem:[%s9 + $0x30] sm:$0xf]
  %v997 = vld [vmem:[%s9 + $0x34] sm:$0xf]
  %v998 = vld [vmem:[%s9 + $0x38] sm:$0xf]
  %v999 = vld [vmem:[%s9 + $0x3c] sm:$0xf]
  %v1000 = vld [vmem:[%s10] sm:$0x1]
  %v1002 = vlaneseq
  %v1003 = vshrl.u32 %v1002, 7
  %v1004 = vsub.s32 0, %v1003
  %v1005 = vrot.slane %v1000, %v1004
  %v1023 = vunpack.c.l.b16 %v984
  %v1024 = vunpack.c.l.b16 %v985
  %v1025 = vunpack.c.l.b16 %v986
  %v1026 = vunpack.c.l.b16 %v987
  %v1027 = vunpack.c.l.b16 %v988
  %v1028 = vunpack.c.l.b16 %v989
  %v1029 = vunpack.c.l.b16 %v990
  %v1030 = vunpack.c.l.b16 %v991
  %v1031 = vunpack.c.l.b16 %v992
  %v1032 = vunpack.c.l.b16 %v993
  %v1033 = vunpack.c.l.b16 %v994
  %v1034 = vunpack.c.l.b16 %v995
  %v1035 = vunpack.c.l.b16 %v996
  %v1036 = vunpack.c.l.b16 %v997
  %v1037 = vunpack.c.l.b16 %v998
  %v1038 = vunpack.c.l.b16 %v999
  %v1039 = vpack.c.b16 %v1024, %v1023
  %v1040 = vpack.c.b16 %v1026, %v1025
  %v1041 = vpack.c.b16 %v1028, %v1027
  %v1042 = vpack.c.b16 %v1030, %v1029
  %v1043 = vpack.c.b16 %v1032, %v1031
  %v1044 = vpack.c.b16 %v1034, %v1033
  %v1045 = vpack.c.b16 %v1036, %v1035
  %v1046 = vpack.c.b16 %v1038, %v1037
  %1055 = vmatprep.subr.bf16.mxu0 0
  %1056 = vmatpush1.bf16.msra.mxu0 %v1046
  %1057 = vmatprep.subr.bf16.mxu0 0
  %1058 = vmatpush1.bf16.msra.mxu0 %v1045
  %1059 = vmatprep.subr.bf16.mxu0 0
  %1060 = vmatpush1.bf16.msra.mxu0 %v1044
  %1061 = vmatprep.subr.bf16.mxu0 0
  %1062 = vmatpush1.bf16.msra.mxu0 %v1043
  %1063 = vmatprep.subr.bf16.mxu0 0
  %1064 = vmatpush1.bf16.msra.mxu0 %v1042
  %1065 = vmatprep.subr.bf16.mxu0 0
  %1066 = vmatpush1.bf16.msra.mxu0 %v1041
  %1067 = vmatprep.subr.bf16.mxu0 0
  %1068 = vmatpush1.bf16.msra.mxu0 %v1040
  %1069 = vmatprep.subr.bf16.mxu0 0
  %1070 = vmatpush1.bf16.msra.mxu0 %v1039
  %1071 = vmatprep.subr.bf16.mxu0 0
  %1072 = vmatpush2.bf16.msra.mxu0 0
  %1073 = vmatprep.subr.bf16.mxu0 0
  %1074 = vmatpush2.bf16.msra.mxu0 0
  %1075 = vmatprep.subr.bf16.mxu0 0
  %1076 = vmatpush2.bf16.msra.mxu0 0
  %1077 = vmatprep.subr.bf16.mxu0 0
  %1078 = vmatpush2.bf16.msra.mxu0 0
  %1079 = vmatprep.subr.bf16.mxu0 0
  %1080 = vmatpush2.bf16.msra.mxu0 0
  %1081 = vmatprep.subr.bf16.mxu0 0
  %1082 = vmatpush2.bf16.msra.mxu0 0
  %1083 = vmatprep.subr.bf16.mxu0 0
  %1084 = vmatpush2.bf16.msra.mxu0 0
  %1085 = vmatprep.subr.bf16.mxu0 0
  %1086 = vmatpush2.bf16.msra.mxu0 0
  %1087 = vmatprep.mubr.bf16.mxu0 0
  %1088 = vmatmul.mubr.bf16.gmra.mxu0 %v976
  %v1089 = vpop.f32.mrf.mxu0
  %v1090 = vadd.f32 %v1005, %v1089
  %v1091 = vpop.f32.mrf.mxu0
  %v1092 = vpop.f32.mrf.mxu0
  %v1093 = vadd.f32 %v1005, %v1092
  %v1094 = vpop.f32.mrf.mxu0
  %1095 = vmatprep.mubr.bf16.mxu0 0
  %1096 = vmatmul.mubr.bf16.gmra.mxu0 %v977
  %v1097 = vpop.f32.mrf.mxu0
  %v1098 = vadd.f32 %v1005, %v1097
  %v1099 = vpop.f32.mrf.mxu0
  %v1100 = vpop.f32.mrf.mxu0
  %v1101 = vadd.f32 %v1005, %v1100
  %v1102 = vpop.f32.mrf.mxu0
  %1103 = vmatprep.mubr.bf16.mxu0 0
  %1104 = vmatmul.mubr.bf16.gmra.mxu0 %v978
  %v1105 = vpop.f32.mrf.mxu0
  %v1106 = vadd.f32 %v1005, %v1105
  %v1107 = vpop.f32.mrf.mxu0
  %v1108 = vpop.f32.mrf.mxu0
  %v1109 = vadd.f32 %v1005, %v1108
  %v1110 = vpop.f32.mrf.mxu0
  %1111 = vmatprep.mubr.bf16.mxu0 0
  %1112 = vmatmul.mubr.bf16.gmra.mxu0 %v979
  %v1113 = vpop.f32.mrf.mxu0
  %v1114 = vadd.f32 %v1005, %v1113
  %v1115 = vpop.f32.mrf.mxu0
  %v1116 = vpop.f32.mrf.mxu0
  %v1117 = vadd.f32 %v1005, %v1116
  %v1118 = vpop.f32.mrf.mxu0
  %1119 = vmatprep.mubr.bf16.mxu0 0
  %1120 = vmatmul.mubr.bf16.gmra.mxu0 %v980
  %v1121 = vpop.f32.mrf.mxu0
  %v1122 = vadd.f32 %v1005, %v1121
  %v1123 = vpop.f32.mrf.mxu0
  %v1124 = vpop.f32.mrf.mxu0
  %v1125 = vadd.f32 %v1005, %v1124
  %v1126 = vpop.f32.mrf.mxu0
  %1127 = vmatprep.mubr.bf16.mxu0 0
  %1128 = vmatmul.mubr.bf16.gmra.mxu0 %v981
  %v1129 = vpop.f32.mrf.mxu0
  %v1130 = vadd.f32 %v1005, %v1129
  %v1131 = vpop.f32.mrf.mxu0
  %v1132 = vpop.f32.mrf.mxu0
  %v1133 = vadd.f32 %v1005, %v1132
  %v1134 = vpop.f32.mrf.mxu0
  %1135 = vmatprep.mubr.bf16.mxu0 0
  %1136 = vmatmul.mubr.bf16.gmra.mxu0 %v982
  %v1137 = vpop.f32.mrf.mxu0
  %v1138 = vadd.f32 %v1005, %v1137
  %v1139 = vpop.f32.mrf.mxu0
  %v1140 = vpop.f32.mrf.mxu0
  %v1141 = vadd.f32 %v1005, %v1140
  %v1142 = vpop.f32.mrf.mxu0
  %1143 = vmatprep.mubr.bf16.mxu0 0
  %1144 = vmatmul.mubr.bf16.gmra.mxu0 %v983
  %v1145 = vpop.f32.mrf.mxu0
  %v1146 = vadd.f32 %v1005, %v1145
  %v1147 = vpop.f32.mrf.mxu0
  %v1148 = vpop.f32.mrf.mxu0
  %v1149 = vadd.f32 %v1005, %v1148
  %v1150 = vpop.f32.mrf.mxu0
  %1151 = vdwg.mxu0
  %v1152 = vmax.f32 %v1090, 0.0
  %v1153 = vmax.f32 %v1093, 0.0
  %v1154 = vmax.f32 %v1098, 0.0
  %v1155 = vmax.f32 %v1101, 0.0
  %v1156 = vmax.f32 %v1106, 0.0
  %v1157 = vmax.f32 %v1109, 0.0
  %v1158 = vmax.f32 %v1114, 0.0
  %v1159 = vmax.f32 %v1117, 0.0
  %v1160 = vmax.f32 %v1122, 0.0
  %v1161 = vmax.f32 %v1125, 0.0
  %v1162 = vmax.f32 %v1130, 0.0
  %v1163 = vmax.f32 %v1133, 0.0
  %v1164 = vmax.f32 %v1138, 0.0
  %v1165 = vmax.f32 %v1141, 0.0
  %v1166 = vmax.f32 %v1146, 0.0
  %v1167 = vmax.f32 %v1149, 0.0
  %v1168 = vpack.c.bf16 %v1153, %v1152
  %v1169 = vpack.c.bf16 %v1155, %v1154
  %v1170 = vpack.c.bf16 %v1157, %v1156
  %v1171 = vpack.c.bf16 %v1159, %v1158
  %v1172 = vpack.c.bf16 %v1161, %v1160
  %v1173 = vpack.c.bf16 %v1163, %v1162
  %v1174 = vpack.c.bf16 %v1165, %v1164
  %v1175 = vpack.c.bf16 %v1167, %v1166
  %1176 = vmatprep.subr.bf16.mxu0 0
  %1177 = vmatpush1.bf16.msra.mxu0 %v1175
  %1178 = vmatprep.subr.bf16.mxu0 0
  %1179 = vmatpush1.bf16.msra.mxu0 %v1174
  %1180 = vmatprep.subr.bf16.mxu0 0
  %1181 = vmatpush1.bf16.msra.mxu0 %v1173
  %1182 = vmatprep.subr.bf16.mxu0 0
  %1183 = vmatpush1.bf16.msra.mxu0 %v1172
  %1184 = vmatprep.subr.bf16.mxu0 0
  %1185 = vmatpush1.bf16.msra.mxu0 %v1171
  %1186 = vmatprep.subr.bf16.mxu0 0
  %1187 = vmatpush1.bf16.msra.mxu0 %v1170
  %1188 = vmatprep.subr.bf16.mxu0 0
  %1189 = vmatpush1.bf16.msra.mxu0 %v1169
  %1190 = vmatprep.subr.bf16.mxu0 0
  %1191 = vmatpush1.bf16.msra.mxu0 %v1168
  %1192 = vmatprep.subr.bf16.mxu0 0
  %1193 = vmatpush2.bf16.msra.mxu0 0
  %1194 = vmatprep.subr.bf16.mxu0 0
  %1195 = vmatpush2.bf16.msra.mxu0 0
  %1196 = vmatprep.subr.bf16.mxu0 0
  %1197 = vmatpush2.bf16.msra.mxu0 0
  %1198 = vmatprep.subr.bf16.mxu0 0
  %1199 = vmatpush2.bf16.msra.mxu0 0
  %1200 = vmatprep.subr.bf16.mxu0 0
  %1201 = vmatpush2.bf16.msra.mxu0 0
  %1202 = vmatprep.subr.bf16.mxu0 0
  %1203 = vmatpush2.bf16.msra.mxu0 0
  %1204 = vmatprep.subr.bf16.mxu0 0
  %1205 = vmatpush2.bf16.msra.mxu0 0
  %1206 = vmatprep.subr.bf16.mxu0 0
  %1207 = vmatpush2.bf16.msra.mxu0 0
  %1208 = vmatprep.mubr.bf16.mxu0 0
  %1209 = vmatmul.mubr.bf16.gmra.mxu0 %v134
  %v1210 = vpop.f32.mrf.mxu0
  %v1211 = vadd.f32 0.0, %v1210
  %v1212 = vpop.f32.mrf.mxu0
  %v1213 = vpop.f32.mrf.mxu0
  %v1214 = vadd.f32 0.0, %v1213
  %v1215 = vpop.f32.mrf.mxu0
  %1216 = vmatprep.mubr.bf16.mxu0 0
  %1217 = vmatmul.mubr.bf16.gmra.mxu0 %v135
  %v1218 = vpop.f32.mrf.mxu0
  %v1219 = vadd.f32 0.0, %v1218
  %v1220 = vpop.f32.mrf.mxu0
  %v1221 = vpop.f32.mrf.mxu0
  %v1222 = vadd.f32 0.0, %v1221
  %v1223 = vpop.f32.mrf.mxu0
  %1224 = vmatprep.mubr.bf16.mxu0 0
  %1225 = vmatmul.mubr.bf16.gmra.mxu0 %v136
  %v1226 = vpop.f32.mrf.mxu0
  %v1227 = vadd.f32 0.0, %v1226
  %v1228 = vpop.f32.mrf.mxu0
  %v1229 = vpop.f32.mrf.mxu0
  %v1230 = vadd.f32 0.0, %v1229
  %v1231 = vpop.f32.mrf.mxu0
  %1232 = vmatprep.mubr.bf16.mxu0 0
  %1233 = vmatmul.mubr.bf16.gmra.mxu0 %v137
  %v1234 = vpop.f32.mrf.mxu0
  %v1235 = vadd.f32 0.0, %v1234
  %v1236 = vpop.f32.mrf.mxu0
  %v1237 = vpop.f32.mrf.mxu0
  %v1238 = vadd.f32 0.0, %v1237
  %v1239 = vpop.f32.mrf.mxu0
  %1240 = vmatprep.mubr.bf16.mxu0 0
  %1241 = vmatmul.mubr.bf16.gmra.mxu0 %v138
  %v1242 = vpop.f32.mrf.mxu0
  %v1243 = vadd.f32 0.0, %v1242
  %v1244 = vpop.f32.mrf.mxu0
  %v1245 = vpop.f32.mrf.mxu0
  %v1246 = vadd.f32 0.0, %v1245
  %v1247 = vpop.f32.mrf.mxu0
  %1248 = vmatprep.mubr.bf16.mxu0 0
  %1249 = vmatmul.mubr.bf16.gmra.mxu0 %v139
  %v1250 = vpop.f32.mrf.mxu0
  %v1251 = vadd.f32 0.0, %v1250
  %v1252 = vpop.f32.mrf.mxu0
  %v1253 = vpop.f32.mrf.mxu0
  %v1254 = vadd.f32 0.0, %v1253
  %v1255 = vpop.f32.mrf.mxu0
  %1256 = vmatprep.mubr.bf16.mxu0 0
  %1257 = vmatmul.mubr.bf16.gmra.mxu0 %v140
  %v1258 = vpop.f32.mrf.mxu0
  %v1259 = vadd.f32 0.0, %v1258
  %v1260 = vpop.f32.mrf.mxu0
  %v1261 = vpop.f32.mrf.mxu0
  %v1262 = vadd.f32 0.0, %v1261
  %v1263 = vpop.f32.mrf.mxu0
  %1264 = vmatprep.mubr.bf16.mxu0 0
  %1265 = vmatmul.mubr.bf16.gmra.mxu0 %v141
  %v1266 = vpop.f32.mrf.mxu0
  %v1267 = vadd.f32 0.0, %v1266
  %v1268 = vpop.f32.mrf.mxu0
  %v1269 = vpop.f32.mrf.mxu0
  %v1270 = vadd.f32 0.0, %v1269
  %v1271 = vpop.f32.mrf.mxu0
  %1272 = vdwg.mxu0
  %v1273 = vpack.c.bf16 %v1214, %v1211
  %v1274 = vpack.c.bf16 %v1222, %v1219
  %v1275 = vpack.c.bf16 %v1230, %v1227
  %v1276 = vpack.c.bf16 %v1238, %v1235
  %v1277 = vpack.c.bf16 %v1246, %v1243
  %v1278 = vpack.c.bf16 %v1254, %v1251
  %v1279 = vpack.c.bf16 %v1262, %v1259
  %v1280 = vpack.c.bf16 %v1270, %v1267
  %v1281 = vld [vmem:[%s11] sm:$0xf]
  %v1282 = vld [vmem:[%s11 + $0x4] sm:$0xf]
  %v1283 = vld [vmem:[%s11 + $0x8] sm:$0xf]
  %v1284 = vld [vmem:[%s11 + $0xc] sm:$0xf]
  %v1285 = vld [vmem:[%s11 + $0x10] sm:$0xf]
  %v1286 = vld [vmem:[%s11 + $0x14] sm:$0xf]
  %v1287 = vld [vmem:[%s11 + $0x18] sm:$0xf]
  %v1288 = vld [vmem:[%s11 + $0x1c] sm:$0xf]
  %v1289 = vld [vmem:[%s11 + $0x20] sm:$0xf]
  %v1290 = vld [vmem:[%s11 + $0x24] sm:$0xf]
  %v1291 = vld [vmem:[%s11 + $0x28] sm:$0xf]
  %v1292 = vld [vmem:[%s11 + $0x2c] sm:$0xf]
  %v1293 = vld [vmem:[%s11 + $0x30] sm:$0xf]
  %v1294 = vld [vmem:[%s11 + $0x34] sm:$0xf]
  %v1295 = vld [vmem:[%s11 + $0x38] sm:$0xf]
  %v1296 = vld [vmem:[%s11 + $0x3c] sm:$0xf]
  %v1297 = vld [vmem:[%s12] sm:$0x1]
  %v1299 = vlaneseq
  %v1300 = vshrl.u32 %v1299, 7
  %v1301 = vsub.s32 0, %v1300
  %v1302 = vrot.slane %v1297, %v1301
  %v1320 = vunpack.c.l.b16 %v1281
  %v1321 = vunpack.c.l.b16 %v1282
  %v1322 = vunpack.c.l.b16 %v1283
  %v1323 = vunpack.c.l.b16 %v1284
  %v1324 = vunpack.c.l.b16 %v1285
  %v1325 = vunpack.c.l.b16 %v1286
  %v1326 = vunpack.c.l.b16 %v1287
  %v1327 = vunpack.c.l.b16 %v1288
  %v1328 = vunpack.c.l.b16 %v1289
  %v1329 = vunpack.c.l.b16 %v1290
  %v1330 = vunpack.c.l.b16 %v1291
  %v1331 = vunpack.c.l.b16 %v1292
  %v1332 = vunpack.c.l.b16 %v1293
  %v1333 = vunpack.c.l.b16 %v1294
  %v1334 = vunpack.c.l.b16 %v1295
  %v1335 = vunpack.c.l.b16 %v1296
  %v1336 = vpack.c.b16 %v1321, %v1320
  %v1337 = vpack.c.b16 %v1323, %v1322
  %v1338 = vpack.c.b16 %v1325, %v1324
  %v1339 = vpack.c.b16 %v1327, %v1326
  %v1340 = vpack.c.b16 %v1329, %v1328
  %v1341 = vpack.c.b16 %v1331, %v1330
  %v1342 = vpack.c.b16 %v1333, %v1332
  %v1343 = vpack.c.b16 %v1335, %v1334
  %1352 = vmatprep.subr.bf16.mxu0 0
  %1353 = vmatpush1.bf16.msra.mxu0 %v1343
  %1354 = vmatprep.subr.bf16.mxu0 0
  %1355 = vmatpush1.bf16.msra.mxu0 %v1342
  %1356 = vmatprep.subr.bf16.mxu0 0
  %1357 = vmatpush1.bf16.msra.mxu0 %v1341
  %1358 = vmatprep.subr.bf16.mxu0 0
  %1359 = vmatpush1.bf16.msra.mxu0 %v1340
  %1360 = vmatprep.subr.bf16.mxu0 0
  %1361 = vmatpush1.bf16.msra.mxu0 %v1339
  %1362 = vmatprep.subr.bf16.mxu0 0
  %1363 = vmatpush1.bf16.msra.mxu0 %v1338
  %1364 = vmatprep.subr.bf16.mxu0 0
  %1365 = vmatpush1.bf16.msra.mxu0 %v1337
  %1366 = vmatprep.subr.bf16.mxu0 0
  %1367 = vmatpush1.bf16.msra.mxu0 %v1336
  %1368 = vmatprep.subr.bf16.mxu0 0
  %1369 = vmatpush2.bf16.msra.mxu0 0
  %1370 = vmatprep.subr.bf16.mxu0 0
  %1371 = vmatpush2.bf16.msra.mxu0 0
  %1372 = vmatprep.subr.bf16.mxu0 0
  %1373 = vmatpush2.bf16.msra.mxu0 0
  %1374 = vmatprep.subr.bf16.mxu0 0
  %1375 = vmatpush2.bf16.msra.mxu0 0
  %1376 = vmatprep.subr.bf16.mxu0 0
  %1377 = vmatpush2.bf16.msra.mxu0 0
  %1378 = vmatprep.subr.bf16.mxu0 0
  %1379 = vmatpush2.bf16.msra.mxu0 0
  %1380 = vmatprep.subr.bf16.mxu0 0
  %1381 = vmatpush2.bf16.msra.mxu0 0
  %1382 = vmatprep.subr.bf16.mxu0 0
  %1383 = vmatpush2.bf16.msra.mxu0 0
  %1384 = vmatprep.mubr.bf16.mxu0 0
  %1385 = vmatmul.mubr.bf16.gmra.mxu0 %v1273
  %v1386 = vpop.f32.mrf.mxu0
  %v1387 = vadd.f32 %v1302, %v1386
  %v1388 = vpop.f32.mrf.mxu0
  %v1389 = vpop.f32.mrf.mxu0
  %v1390 = vadd.f32 %v1302, %v1389
  %v1391 = vpop.f32.mrf.mxu0
  %1392 = vmatprep.mubr.bf16.mxu0 0
  %1393 = vmatmul.mubr.bf16.gmra.mxu0 %v1274
  %v1394 = vpop.f32.mrf.mxu0
  %v1395 = vadd.f32 %v1302, %v1394
  %v1396 = vpop.f32.mrf.mxu0
  %v1397 = vpop.f32.mrf.mxu0
  %v1398 = vadd.f32 %v1302, %v1397
  %v1399 = vpop.f32.mrf.mxu0
  %1400 = vmatprep.mubr.bf16.mxu0 0
  %1401 = vmatmul.mubr.bf16.gmra.mxu0 %v1275
  %v1402 = vpop.f32.mrf.mxu0
  %v1403 = vadd.f32 %v1302, %v1402
  %v1404 = vpop.f32.mrf.mxu0
  %v1405 = vpop.f32.mrf.mxu0
  %v1406 = vadd.f32 %v1302, %v1405
  %v1407 = vpop.f32.mrf.mxu0
  %1408 = vmatprep.mubr.bf16.mxu0 0
  %1409 = vmatmul.mubr.bf16.gmra.mxu0 %v1276
  %v1410 = vpop.f32.mrf.mxu0
  %v1411 = vadd.f32 %v1302, %v1410
  %v1412 = vpop.f32.mrf.mxu0
  %v1413 = vpop.f32.mrf.mxu0
  %v1414 = vadd.f32 %v1302, %v1413
  %v1415 = vpop.f32.mrf.mxu0
  %1416 = vmatprep.mubr.bf16.mxu0 0
  %1417 = vmatmul.mubr.bf16.gmra.mxu0 %v1277
  %v1418 = vpop.f32.mrf.mxu0
  %v1419 = vadd.f32 %v1302, %v1418
  %v1420 = vpop.f32.mrf.mxu0
  %v1421 = vpop.f32.mrf.mxu0
  %v1422 = vadd.f32 %v1302, %v1421
  %v1423 = vpop.f32.mrf.mxu0
  %1424 = vmatprep.mubr.bf16.mxu0 0
  %1425 = vmatmul.mubr.bf16.gmra.mxu0 %v1278
  %v1426 = vpop.f32.mrf.mxu0
  %v1427 = vadd.f32 %v1302, %v1426
  %v1428 = vpop.f32.mrf.mxu0
  %v1429 = vpop.f32.mrf.mxu0
  %v1430 = vadd.f32 %v1302, %v1429
  %v1431 = vpop.f32.mrf.mxu0
  %1432 = vmatprep.mubr.bf16.mxu0 0
  %1433 = vmatmul.mubr.bf16.gmra.mxu0 %v1279
  %v1434 = vpop.f32.mrf.mxu0
  %v1435 = vadd.f32 %v1302, %v1434
  %v1436 = vpop.f32.mrf.mxu0
  %v1437 = vpop.f32.mrf.mxu0
  %v1438 = vadd.f32 %v1302, %v1437
  %v1439 = vpop.f32.mrf.mxu0
  %1440 = vmatprep.mubr.bf16.mxu0 0
  %1441 = vmatmul.mubr.bf16.gmra.mxu0 %v1280
  %v1442 = vpop.f32.mrf.mxu0
  %v1443 = vadd.f32 %v1302, %v1442
  %v1444 = vpop.f32.mrf.mxu0
  %v1445 = vpop.f32.mrf.mxu0
  %v1446 = vadd.f32 %v1302, %v1445
  %v1447 = vpop.f32.mrf.mxu0
  %1448 = vdwg.mxu0
  %v1449 = vmax.f32 %v1387, 0.0
  %v1450 = vmax.f32 %v1390, 0.0
  %v1451 = vmax.f32 %v1395, 0.0
  %v1452 = vmax.f32 %v1398, 0.0
  %v1453 = vmax.f32 %v1403, 0.0
  %v1454 = vmax.f32 %v1406, 0.0
  %v1455 = vmax.f32 %v1411, 0.0
  %v1456 = vmax.f32 %v1414, 0.0
  %v1457 = vmax.f32 %v1419, 0.0
  %v1458 = vmax.f32 %v1422, 0.0
  %v1459 = vmax.f32 %v1427, 0.0
  %v1460 = vmax.f32 %v1430, 0.0
  %v1461 = vmax.f32 %v1435, 0.0
  %v1462 = vmax.f32 %v1438, 0.0
  %v1463 = vmax.f32 %v1443, 0.0
  %v1464 = vmax.f32 %v1446, 0.0
  %v1465 = vpack.c.bf16 %v1450, %v1449
  %v1466 = vpack.c.bf16 %v1452, %v1451
  %v1467 = vpack.c.bf16 %v1454, %v1453
  %v1468 = vpack.c.bf16 %v1456, %v1455
  %v1469 = vpack.c.bf16 %v1458, %v1457
  %v1470 = vpack.c.bf16 %v1460, %v1459
  %v1471 = vpack.c.bf16 %v1462, %v1461
  %v1472 = vpack.c.bf16 %v1464, %v1463
  %v1473 = vld [vmem:[%s13] sm:$0xf]
  %v1474 = vld [vmem:[%s13 + $0x4] sm:$0xf]
  %v1475 = vld [vmem:[%s13 + $0x8] sm:$0xf]
  %v1476 = vld [vmem:[%s13 + $0xc] sm:$0xf]
  %v1477 = vld [vmem:[%s13 + $0x10] sm:$0xf]
  %v1478 = vld [vmem:[%s13 + $0x14] sm:$0xf]
  %v1479 = vld [vmem:[%s13 + $0x18] sm:$0xf]
  %v1480 = vld [vmem:[%s13 + $0x1c] sm:$0xf]
  %v1481 = vld [vmem:[%s13 + $0x20] sm:$0xf]
  %v1482 = vld [vmem:[%s13 + $0x24] sm:$0xf]
  %v1483 = vld [vmem:[%s13 + $0x28] sm:$0xf]
  %v1484 = vld [vmem:[%s13 + $0x2c] sm:$0xf]
  %v1485 = vld [vmem:[%s13 + $0x30] sm:$0xf]
  %v1486 = vld [vmem:[%s13 + $0x34] sm:$0xf]
  %v1487 = vld [vmem:[%s13 + $0x38] sm:$0xf]
  %v1488 = vld [vmem:[%s13 + $0x3c] sm:$0xf]
  %v1489 = vld [vmem:[%s14] sm:$0x1]
  %v1491 = vlaneseq
  %v1492 = vshrl.u32 %v1491, 7
  %v1493 = vsub.s32 0, %v1492
  %v1494 = vrot.slane %v1489, %v1493
  %v1512 = vunpack.c.l.b16 %v1473
  %v1513 = vunpack.c.l.b16 %v1474
  %v1514 = vunpack.c.l.b16 %v1475
  %v1515 = vunpack.c.l.b16 %v1476
  %v1516 = vunpack.c.l.b16 %v1477
  %v1517 = vunpack.c.l.b16 %v1478
  %v1518 = vunpack.c.l.b16 %v1479
  %v1519 = vunpack.c.l.b16 %v1480
  %v1520 = vunpack.c.l.b16 %v1481
  %v1521 = vunpack.c.l.b16 %v1482
  %v1522 = vunpack.c.l.b16 %v1483
  %v1523 = vunpack.c.l.b16 %v1484
  %v1524 = vunpack.c.l.b16 %v1485
  %v1525 = vunpack.c.l.b16 %v1486
  %v1526 = vunpack.c.l.b16 %v1487
  %v1527 = vunpack.c.l.b16 %v1488
  %v1528 = vpack.c.b16 %v1513, %v1512
  %v1529 = vpack.c.b16 %v1515, %v1514
  %v1530 = vpack.c.b16 %v1517, %v1516
  %v1531 = vpack.c.b16 %v1519, %v1518
  %v1532 = vpack.c.b16 %v1521, %v1520
  %v1533 = vpack.c.b16 %v1523, %v1522
  %v1534 = vpack.c.b16 %v1525, %v1524
  %v1535 = vpack.c.b16 %v1527, %v1526
  %1544 = vmatprep.subr.bf16.mxu0 0
  %1545 = vmatpush1.bf16.msra.mxu0 %v1535
  %1546 = vmatprep.subr.bf16.mxu0 0
  %1547 = vmatpush1.bf16.msra.mxu0 %v1534
  %1548 = vmatprep.subr.bf16.mxu0 0
  %1549 = vmatpush1.bf16.msra.mxu0 %v1533
  %1550 = vmatprep.subr.bf16.mxu0 0
  %1551 = vmatpush1.bf16.msra.mxu0 %v1532
  %1552 = vmatprep.subr.bf16.mxu0 0
  %1553 = vmatpush1.bf16.msra.mxu0 %v1531
  %1554 = vmatprep.subr.bf16.mxu0 0
  %1555 = vmatpush1.bf16.msra.mxu0 %v1530
  %1556 = vmatprep.subr.bf16.mxu0 0
  %1557 = vmatpush1.bf16.msra.mxu0 %v1529
  %1558 = vmatprep.subr.bf16.mxu0 0
  %1559 = vmatpush1.bf16.msra.mxu0 %v1528
  %1560 = vmatprep.subr.bf16.mxu0 0
  %1561 = vmatpush2.bf16.msra.mxu0 0
  %1562 = vmatprep.subr.bf16.mxu0 0
  %1563 = vmatpush2.bf16.msra.mxu0 0
  %1564 = vmatprep.subr.bf16.mxu0 0
  %1565 = vmatpush2.bf16.msra.mxu0 0
  %1566 = vmatprep.subr.bf16.mxu0 0
  %1567 = vmatpush2.bf16.msra.mxu0 0
  %1568 = vmatprep.subr.bf16.mxu0 0
  %1569 = vmatpush2.bf16.msra.mxu0 0
  %1570 = vmatprep.subr.bf16.mxu0 0
  %1571 = vmatpush2.bf16.msra.mxu0 0
  %1572 = vmatprep.subr.bf16.mxu0 0
  %1573 = vmatpush2.bf16.msra.mxu0 0
  %1574 = vmatprep.subr.bf16.mxu0 0
  %1575 = vmatpush2.bf16.msra.mxu0 0
  %1576 = vmatprep.mubr.bf16.mxu0 0
  %1577 = vmatmul.mubr.bf16.gmra.mxu0 %v1465
  %v1578 = vpop.f32.mrf.mxu0
  %v1579 = vadd.f32 %v1494, %v1578
  %v1580 = vpop.f32.mrf.mxu0
  %v1581 = vpop.f32.mrf.mxu0
  %v1582 = vadd.f32 %v1494, %v1581
  %v1583 = vpop.f32.mrf.mxu0
  %1584 = vmatprep.mubr.bf16.mxu0 0
  %1585 = vmatmul.mubr.bf16.gmra.mxu0 %v1466
  %v1586 = vpop.f32.mrf.mxu0
  %v1587 = vadd.f32 %v1494, %v1586
  %v1588 = vpop.f32.mrf.mxu0
  %v1589 = vpop.f32.mrf.mxu0
  %v1590 = vadd.f32 %v1494, %v1589
  %v1591 = vpop.f32.mrf.mxu0
  %1592 = vmatprep.mubr.bf16.mxu0 0
  %1593 = vmatmul.mubr.bf16.gmra.mxu0 %v1467
  %v1594 = vpop.f32.mrf.mxu0
  %v1595 = vadd.f32 %v1494, %v1594
  %v1596 = vpop.f32.mrf.mxu0
  %v1597 = vpop.f32.mrf.mxu0
  %v1598 = vadd.f32 %v1494, %v1597
  %v1599 = vpop.f32.mrf.mxu0
  %1600 = vmatprep.mubr.bf16.mxu0 0
  %1601 = vmatmul.mubr.bf16.gmra.mxu0 %v1468
  %v1602 = vpop.f32.mrf.mxu0
  %v1603 = vadd.f32 %v1494, %v1602
  %v1604 = vpop.f32.mrf.mxu0
  %v1605 = vpop.f32.mrf.mxu0
  %v1606 = vadd.f32 %v1494, %v1605
  %v1607 = vpop.f32.mrf.mxu0
  %1608 = vmatprep.mubr.bf16.mxu0 0
  %1609 = vmatmul.mubr.bf16.gmra.mxu0 %v1469
  %v1610 = vpop.f32.mrf.mxu0
  %v1611 = vadd.f32 %v1494, %v1610
  %v1612 = vpop.f32.mrf.mxu0
  %v1613 = vpop.f32.mrf.mxu0
  %v1614 = vadd.f32 %v1494, %v1613
  %v1615 = vpop.f32.mrf.mxu0
  %1616 = vmatprep.mubr.bf16.mxu0 0
  %1617 = vmatmul.mubr.bf16.gmra.mxu0 %v1470
  %v1618 = vpop.f32.mrf.mxu0
  %v1619 = vadd.f32 %v1494, %v1618
  %v1620 = vpop.f32.mrf.mxu0
  %v1621 = vpop.f32.mrf.mxu0
  %v1622 = vadd.f32 %v1494, %v1621
  %v1623 = vpop.f32.mrf.mxu0
  %1624 = vmatprep.mubr.bf16.mxu0 0
  %1625 = vmatmul.mubr.bf16.gmra.mxu0 %v1471
  %v1626 = vpop.f32.mrf.mxu0
  %v1627 = vadd.f32 %v1494, %v1626
  %v1628 = vpop.f32.mrf.mxu0
  %v1629 = vpop.f32.mrf.mxu0
  %v1630 = vadd.f32 %v1494, %v1629
  %v1631 = vpop.f32.mrf.mxu0
  %1632 = vmatprep.mubr.bf16.mxu0 0
  %1633 = vmatmul.mubr.bf16.gmra.mxu0 %v1472
  %v1634 = vpop.f32.mrf.mxu0
  %v1635 = vadd.f32 %v1494, %v1634
  %v1636 = vpop.f32.mrf.mxu0
  %v1637 = vpop.f32.mrf.mxu0
  %v1638 = vadd.f32 %v1494, %v1637
  %v1639 = vpop.f32.mrf.mxu0
  %1640 = vdwg.mxu0
  %v1641 = vmax.f32 %v1579, 0.0
  %v1642 = vmax.f32 %v1582, 0.0
  %v1643 = vmax.f32 %v1587, 0.0
  %v1644 = vmax.f32 %v1590, 0.0
  %v1645 = vmax.f32 %v1595, 0.0
  %v1646 = vmax.f32 %v1598, 0.0
  %v1647 = vmax.f32 %v1603, 0.0
  %v1648 = vmax.f32 %v1606, 0.0
  %v1649 = vmax.f32 %v1611, 0.0
  %v1650 = vmax.f32 %v1614, 0.0
  %v1651 = vmax.f32 %v1619, 0.0
  %v1652 = vmax.f32 %v1622, 0.0
  %v1653 = vmax.f32 %v1627, 0.0
  %v1654 = vmax.f32 %v1630, 0.0
  %v1655 = vmax.f32 %v1635, 0.0
  %v1656 = vmax.f32 %v1638, 0.0
  %1657 = vmatprep.subr.bf16.mxu0 0
  %1658 = vmatpush1.bf16.msra.mxu0 %v686
  %1659 = vmatprep.subr.bf16.mxu0 0
  %1660 = vmatpush1.bf16.msra.mxu0 %v685
  %1661 = vmatprep.subr.bf16.mxu0 0
  %1662 = vmatpush1.bf16.msra.mxu0 %v684
  %1663 = vmatprep.subr.bf16.mxu0 0
  %1664 = vmatpush1.bf16.msra.mxu0 %v683
  %1665 = vmatprep.subr.bf16.mxu0 0
  %1666 = vmatpush1.bf16.msra.mxu0 %v682
  %1667 = vmatprep.subr.bf16.mxu0 0
  %1668 = vmatpush1.bf16.msra.mxu0 %v681
  %1669 = vmatprep.subr.bf16.mxu0 0
  %1670 = vmatpush1.bf16.msra.mxu0 %v680
  %1671 = vmatprep.subr.bf16.mxu0 0
  %1672 = vmatpush1.bf16.msra.mxu0 %v679
  %1673 = vmatprep.subr.bf16.mxu0 0
  %1674 = vmatpush2.bf16.msra.mxu0 0
  %1675 = vmatprep.subr.bf16.mxu0 0
  %1676 = vmatpush2.bf16.msra.mxu0 0
  %1677 = vmatprep.subr.bf16.mxu0 0
  %1678 = vmatpush2.bf16.msra.mxu0 0
  %1679 = vmatprep.subr.bf16.mxu0 0
  %1680 = vmatpush2.bf16.msra.mxu0 0
  %1681 = vmatprep.subr.bf16.mxu0 0
  %1682 = vmatpush2.bf16.msra.mxu0 0
  %1683 = vmatprep.subr.bf16.mxu0 0
  %1684 = vmatpush2.bf16.msra.mxu0 0
  %1685 = vmatprep.subr.bf16.mxu0 0
  %1686 = vmatpush2.bf16.msra.mxu0 0
  %1687 = vmatprep.subr.bf16.mxu0 0
  %1688 = vmatpush2.bf16.msra.mxu0 0
  %1689 = vmatprep.mubr.bf16.mxu0 0
  %1690 = vmatmul.mubr.bf16.gmra.mxu0 %v85
  %v1691 = vpop.f32.mrf.mxu0
  %v1692 = vadd.f32 0.0, %v1691
  %v1693 = vpop.f32.mrf.mxu0
  %v1694 = vpop.f32.mrf.mxu0
  %v1695 = vpop.f32.mrf.mxu0
  %1696 = vdwg.mxu0
  %1697 = vmatprep.subr.bf16.mxu0 0
  %1698 = vmatpush1.bf16.msra.mxu0 %v1175
  %1699 = vmatprep.subr.bf16.mxu0 0
  %1700 = vmatpush1.bf16.msra.mxu0 %v1174
  %1701 = vmatprep.subr.bf16.mxu0 0
  %1702 = vmatpush1.bf16.msra.mxu0 %v1173
  %1703 = vmatprep.subr.bf16.mxu0 0
  %1704 = vmatpush1.bf16.msra.mxu0 %v1172
  %1705 = vmatprep.subr.bf16.mxu0 0
  %1706 = vmatpush1.bf16.msra.mxu0 %v1171
  %1707 = vmatprep.subr.bf16.mxu0 0
  %1708 = vmatpush1.bf16.msra.mxu0 %v1170
  %1709 = vmatprep.subr.bf16.mxu0 0
  %1710 = vmatpush1.bf16.msra.mxu0 %v1169
  %1711 = vmatprep.subr.bf16.mxu0 0
  %1712 = vmatpush1.bf16.msra.mxu0 %v1168
  %1713 = vmatprep.subr.bf16.mxu0 0
  %1714 = vmatpush2.bf16.msra.mxu0 0
  %1715 = vmatprep.subr.bf16.mxu0 0
  %1716 = vmatpush2.bf16.msra.mxu0 0
  %1717 = vmatprep.subr.bf16.mxu0 0
  %1718 = vmatpush2.bf16.msra.mxu0 0
  %1719 = vmatprep.subr.bf16.mxu0 0
  %1720 = vmatpush2.bf16.msra.mxu0 0
  %1721 = vmatprep.subr.bf16.mxu0 0
  %1722 = vmatpush2.bf16.msra.mxu0 0
  %1723 = vmatprep.subr.bf16.mxu0 0
  %1724 = vmatpush2.bf16.msra.mxu0 0
  %1725 = vmatprep.subr.bf16.mxu0 0
  %1726 = vmatpush2.bf16.msra.mxu0 0
  %1727 = vmatprep.subr.bf16.mxu0 0
  %1728 = vmatpush2.bf16.msra.mxu0 0
  %1729 = vmatprep.mubr.bf16.mxu0 0
  %1730 = vmatmul.mubr.bf16.gmra.mxu0 %v85
  %v1731 = vpop.f32.mrf.mxu0
  %v1732 = vadd.f32 0.0, %v1731
  %v1733 = vpop.f32.mrf.mxu0
  %v1734 = vpop.f32.mrf.mxu0
  %v1735 = vpop.f32.mrf.mxu0
  %1736 = vdwg.mxu0
  %v1737 = vpack.c.bf16 %v1642, %v1641
  %v1738 = vpack.c.bf16 %v1644, %v1643
  %v1739 = vpack.c.bf16 %v1646, %v1645
  %v1740 = vpack.c.bf16 %v1648, %v1647
  %v1741 = vpack.c.bf16 %v1650, %v1649
  %v1742 = vpack.c.bf16 %v1652, %v1651
  %v1743 = vpack.c.bf16 %v1654, %v1653
  %v1744 = vpack.c.bf16 %v1656, %v1655
  %1745 = vmatprep.subr.bf16.mxu0 0
  %1746 = vmatpush1.bf16.msra.mxu0 %v1744
  %1747 = vmatprep.subr.bf16.mxu0 0
  %1748 = vmatpush1.bf16.msra.mxu0 %v1743
  %1749 = vmatprep.subr.bf16.mxu0 0
  %1750 = vmatpush1.bf16.msra.mxu0 %v1742
  %1751 = vmatprep.subr.bf16.mxu0 0
  %1752 = vmatpush1.bf16.msra.mxu0 %v1741
  %1753 = vmatprep.subr.bf16.mxu0 0
  %1754 = vmatpush1.bf16.msra.mxu0 %v1740
  %1755 = vmatprep.subr.bf16.mxu0 0
  %1756 = vmatpush1.bf16.msra.mxu0 %v1739
  %1757 = vmatprep.subr.bf16.mxu0 0
  %1758 = vmatpush1.bf16.msra.mxu0 %v1738
  %1759 = vmatprep.subr.bf16.mxu0 0
  %1760 = vmatpush1.bf16.msra.mxu0 %v1737
  %1761 = vmatprep.subr.bf16.mxu0 0
  %1762 = vmatpush2.bf16.msra.mxu0 0
  %1763 = vmatprep.subr.bf16.mxu0 0
  %1764 = vmatpush2.bf16.msra.mxu0 0
  %1765 = vmatprep.subr.bf16.mxu0 0
  %1766 = vmatpush2.bf16.msra.mxu0 0
  %1767 = vmatprep.subr.bf16.mxu0 0
  %1768 = vmatpush2.bf16.msra.mxu0 0
  %1769 = vmatprep.subr.bf16.mxu0 0
  %1770 = vmatpush2.bf16.msra.mxu0 0
  %1771 = vmatprep.subr.bf16.mxu0 0
  %1772 = vmatpush2.bf16.msra.mxu0 0
  %1773 = vmatprep.subr.bf16.mxu0 0
  %1774 = vmatpush2.bf16.msra.mxu0 0
  %1775 = vmatprep.subr.bf16.mxu0 0
  %1776 = vmatpush2.bf16.msra.mxu0 0
  %1777 = vmatprep.mubr.bf16.mxu0 0
  %1778 = vmatmul.mubr.bf16.gmra.mxu0 %v85
  %v1779 = vpop.f32.mrf.mxu0
  %v1780 = vadd.f32 0.0, %v1779
  %v1781 = vpop.f32.mrf.mxu0
  %v1782 = vpop.f32.mrf.mxu0
  %v1783 = vpop.f32.mrf.mxu0
  %1784 = vdwg.mxu0
  %v1785 = vpack.c.bf16 %v1692, %v1692
  %v1786 = vld [vmem:[%s15] sm:$0xf]
  %v1787 = vld [vmem:[%s15 + $0x4] sm:$0xf]
  %v1788 = vld [vmem:[%s15 + $0x8] sm:$0xf]
  %v1789 = vld [vmem:[%s15 + $0xc] sm:$0xf]
  %v1790 = vld [vmem:[%s15 + $0x10] sm:$0xf]
  %v1791 = vld [vmem:[%s15 + $0x14] sm:$0xf]
  %v1792 = vld [vmem:[%s15 + $0x18] sm:$0xf]
  %v1793 = vld [vmem:[%s15 + $0x1c] sm:$0xf]
  %v1794 = vld [vmem:[%s15 + $0x20] sm:$0xf]
  %v1795 = vld [vmem:[%s15 + $0x24] sm:$0xf]
  %v1796 = vld [vmem:[%s15 + $0x28] sm:$0xf]
  %v1797 = vld [vmem:[%s15 + $0x2c] sm:$0xf]
  %v1798 = vld [vmem:[%s15 + $0x30] sm:$0xf]
  %v1799 = vld [vmem:[%s15 + $0x34] sm:$0xf]
  %v1800 = vld [vmem:[%s15 + $0x38] sm:$0xf]
  %v1801 = vld [vmem:[%s15 + $0x3c] sm:$0xf]
  %v1802 = vpack.c.bf16 %v1732, %v1732
  %v1803 = vld [vmem:[%s15 + $0x40] sm:$0xf]
  %v1804 = vld [vmem:[%s15 + $0x44] sm:$0xf]
  %v1805 = vld [vmem:[%s15 + $0x48] sm:$0xf]
  %v1806 = vld [vmem:[%s15 + $0x4c] sm:$0xf]
  %v1807 = vld [vmem:[%s15 + $0x50] sm:$0xf]
  %v1808 = vld [vmem:[%s15 + $0x54] sm:$0xf]
  %v1809 = vld [vmem:[%s15 + $0x58] sm:$0xf]
  %v1810 = vld [vmem:[%s15 + $0x5c] sm:$0xf]
  %v1811 = vld [vmem:[%s15 + $0x60] sm:$0xf]
  %v1812 = vld [vmem:[%s15 + $0x64] sm:$0xf]
  %v1813 = vld [vmem:[%s15 + $0x68] sm:$0xf]
  %v1814 = vld [vmem:[%s15 + $0x6c] sm:$0xf]
  %v1815 = vld [vmem:[%s15 + $0x70] sm:$0xf]
  %v1816 = vld [vmem:[%s15 + $0x74] sm:$0xf]
  %v1817 = vld [vmem:[%s15 + $0x78] sm:$0xf]
  %v1818 = vld [vmem:[%s15 + $0x7c] sm:$0xf]
  %v1835 = vunpack.c.l.b16 %v1803
  %v1836 = vunpack.c.l.b16 %v1804
  %v1837 = vunpack.c.l.b16 %v1805
  %v1838 = vunpack.c.l.b16 %v1806
  %v1839 = vunpack.c.l.b16 %v1807
  %v1840 = vunpack.c.l.b16 %v1808
  %v1841 = vunpack.c.l.b16 %v1809
  %v1842 = vunpack.c.l.b16 %v1810
  %v1843 = vunpack.c.l.b16 %v1811
  %v1844 = vunpack.c.l.b16 %v1812
  %v1845 = vunpack.c.l.b16 %v1813
  %v1846 = vunpack.c.l.b16 %v1814
  %v1847 = vunpack.c.l.b16 %v1815
  %v1848 = vunpack.c.l.b16 %v1816
  %v1849 = vunpack.c.l.b16 %v1817
  %v1850 = vunpack.c.l.b16 %v1818
  %v1851 = vpack.c.b16 %v1836, %v1835
  %v1852 = vpack.c.b16 %v1838, %v1837
  %v1853 = vpack.c.b16 %v1840, %v1839
  %v1854 = vpack.c.b16 %v1842, %v1841
  %v1855 = vpack.c.b16 %v1844, %v1843
  %v1856 = vpack.c.b16 %v1846, %v1845
  %v1857 = vpack.c.b16 %v1848, %v1847
  %v1858 = vpack.c.b16 %v1850, %v1849
  %1867 = vmatprep.subr.bf16.mxu0 0
  %1868 = vmatpush1.bf16.msra.mxu0 %v1858
  %1869 = vmatprep.subr.bf16.mxu0 0
  %1870 = vmatpush1.bf16.msra.mxu0 %v1857
  %1871 = vmatprep.subr.bf16.mxu0 0
  %1872 = vmatpush1.bf16.msra.mxu0 %v1856
  %1873 = vmatprep.subr.bf16.mxu0 0
  %1874 = vmatpush1.bf16.msra.mxu0 %v1855
  %1875 = vmatprep.subr.bf16.mxu0 0
  %1876 = vmatpush1.bf16.msra.mxu0 %v1854
  %1877 = vmatprep.subr.bf16.mxu0 0
  %1878 = vmatpush1.bf16.msra.mxu0 %v1853
  %1879 = vmatprep.subr.bf16.mxu0 0
  %1880 = vmatpush1.bf16.msra.mxu0 %v1852
  %1881 = vmatprep.subr.bf16.mxu0 0
  %1882 = vmatpush1.bf16.msra.mxu0 %v1851
  %1883 = vmatprep.subr.bf16.mxu0 0
  %1884 = vmatpush2.bf16.msra.mxu0 0
  %1885 = vmatprep.subr.bf16.mxu0 0
  %1886 = vmatpush2.bf16.msra.mxu0 0
  %1887 = vmatprep.subr.bf16.mxu0 0
  %1888 = vmatpush2.bf16.msra.mxu0 0
  %1889 = vmatprep.subr.bf16.mxu0 0
  %1890 = vmatpush2.bf16.msra.mxu0 0
  %1891 = vmatprep.subr.bf16.mxu0 0
  %1892 = vmatpush2.bf16.msra.mxu0 0
  %1893 = vmatprep.subr.bf16.mxu0 0
  %1894 = vmatpush2.bf16.msra.mxu0 0
  %1895 = vmatprep.subr.bf16.mxu0 0
  %1896 = vmatpush2.bf16.msra.mxu0 0
  %1897 = vmatprep.subr.bf16.mxu0 0
  %1898 = vmatpush2.bf16.msra.mxu0 0
  %1899 = vmatprep.mubr.bf16.mxu0 0
  %1900 = vmatmul.mubr.bf16.gmra.mxu0 %v1802
  %v1901 = vpop.f32.mrf.mxu0
  %v1902 = vadd.f32 0.0, %v1901
  %v1903 = vpop.f32.mrf.mxu0
  %v1904 = vpop.f32.mrf.mxu0
  %v1905 = vpop.f32.mrf.mxu0
  %1906 = vdwg.mxu0
  %v1923 = vunpack.c.l.b16 %v1786
  %v1924 = vunpack.c.l.b16 %v1787
  %v1925 = vunpack.c.l.b16 %v1788
  %v1926 = vunpack.c.l.b16 %v1789
  %v1927 = vunpack.c.l.b16 %v1790
  %v1928 = vunpack.c.l.b16 %v1791
  %v1929 = vunpack.c.l.b16 %v1792
  %v1930 = vunpack.c.l.b16 %v1793
  %v1931 = vunpack.c.l.b16 %v1794
  %v1932 = vunpack.c.l.b16 %v1795
  %v1933 = vunpack.c.l.b16 %v1796
  %v1934 = vunpack.c.l.b16 %v1797
  %v1935 = vunpack.c.l.b16 %v1798
  %v1936 = vunpack.c.l.b16 %v1799
  %v1937 = vunpack.c.l.b16 %v1800
  %v1938 = vunpack.c.l.b16 %v1801
  %v1939 = vpack.c.b16 %v1924, %v1923
  %v1940 = vpack.c.b16 %v1926, %v1925
  %v1941 = vpack.c.b16 %v1928, %v1927
  %v1942 = vpack.c.b16 %v1930, %v1929
  %v1943 = vpack.c.b16 %v1932, %v1931
  %v1944 = vpack.c.b16 %v1934, %v1933
  %v1945 = vpack.c.b16 %v1936, %v1935
  %v1946 = vpack.c.b16 %v1938, %v1937
  %1955 = vmatprep.subr.bf16.mxu0 0
  %1956 = vmatpush1.bf16.msra.mxu0 %v1946
  %1957 = vmatprep.subr.bf16.mxu0 0
  %1958 = vmatpush1.bf16.msra.mxu0 %v1945
  %1959 = vmatprep.subr.bf16.mxu0 0
  %1960 = vmatpush1.bf16.msra.mxu0 %v1944
  %1961 = vmatprep.subr.bf16.mxu0 0
  %1962 = vmatpush1.bf16.msra.mxu0 %v1943
  %1963 = vmatprep.subr.bf16.mxu0 0
  %1964 = vmatpush1.bf16.msra.mxu0 %v1942
  %1965 = vmatprep.subr.bf16.mxu0 0
  %1966 = vmatpush1.bf16.msra.mxu0 %v1941
  %1967 = vmatprep.subr.bf16.mxu0 0
  %1968 = vmatpush1.bf16.msra.mxu0 %v1940
  %1969 = vmatprep.subr.bf16.mxu0 0
  %1970 = vmatpush1.bf16.msra.mxu0 %v1939
  %1971 = vmatprep.subr.bf16.mxu0 0
  %1972 = vmatpush2.bf16.msra.mxu0 0
  %1973 = vmatprep.subr.bf16.mxu0 0
  %1974 = vmatpush2.bf16.msra.mxu0 0
  %1975 = vmatprep.subr.bf16.mxu0 0
  %1976 = vmatpush2.bf16.msra.mxu0 0
  %1977 = vmatprep.subr.bf16.mxu0 0
  %1978 = vmatpush2.bf16.msra.mxu0 0
  %1979 = vmatprep.subr.bf16.mxu0 0
  %1980 = vmatpush2.bf16.msra.mxu0 0
  %1981 = vmatprep.subr.bf16.mxu0 0
  %1982 = vmatpush2.bf16.msra.mxu0 0
  %1983 = vmatprep.subr.bf16.mxu0 0
  %1984 = vmatpush2.bf16.msra.mxu0 0
  %1985 = vmatprep.subr.bf16.mxu0 0
  %1986 = vmatpush2.bf16.msra.mxu0 0
  %1987 = vmatprep.mubr.bf16.mxu0 0
  %1988 = vmatmul.mubr.bf16.gmra.mxu0 %v1785
  %v1989 = vpop.f32.mrf.mxu0
  %v1990 = vadd.f32 %v1902, %v1989
  %v1991 = vpop.f32.mrf.mxu0
  %v1992 = vpop.f32.mrf.mxu0
  %v1993 = vpop.f32.mrf.mxu0
  %1994 = vdwg.mxu0
  %v1995 = vpack.c.bf16 %v1780, %v1780
  %v1996 = vld [vmem:[%s15 + $0x80] sm:$0xf]
  %v1997 = vld [vmem:[%s15 + $0x84] sm:$0xf]
  %v1998 = vld [vmem:[%s15 + $0x88] sm:$0xf]
  %v1999 = vld [vmem:[%s15 + $0x8c] sm:$0xf]
  %v2000 = vld [vmem:[%s15 + $0x90] sm:$0xf]
  %v2001 = vld [vmem:[%s15 + $0x94] sm:$0xf]
  %v2002 = vld [vmem:[%s15 + $0x98] sm:$0xf]
  %v2003 = vld [vmem:[%s15 + $0x9c] sm:$0xf]
  %v2004 = vld [vmem:[%s15 + $0xa0] sm:$0xf]
  %v2005 = vld [vmem:[%s15 + $0xa4] sm:$0xf]
  %v2006 = vld [vmem:[%s15 + $0xa8] sm:$0xf]
  %v2007 = vld [vmem:[%s15 + $0xac] sm:$0xf]
  %v2008 = vld [vmem:[%s15 + $0xb0] sm:$0xf]
  %v2009 = vld [vmem:[%s15 + $0xb4] sm:$0xf]
  %v2010 = vld [vmem:[%s15 + $0xb8] sm:$0xf]
  %v2011 = vld [vmem:[%s15 + $0xbc] sm:$0xf]
  %v2028 = vunpack.c.l.b16 %v1996
  %v2029 = vunpack.c.l.b16 %v1997
  %v2030 = vunpack.c.l.b16 %v1998
  %v2031 = vunpack.c.l.b16 %v1999
  %v2032 = vunpack.c.l.b16 %v2000
  %v2033 = vunpack.c.l.b16 %v2001
  %v2034 = vunpack.c.l.b16 %v2002
  %v2035 = vunpack.c.l.b16 %v2003
  %v2036 = vunpack.c.l.b16 %v2004
  %v2037 = vunpack.c.l.b16 %v2005
  %v2038 = vunpack.c.l.b16 %v2006
  %v2039 = vunpack.c.l.b16 %v2007
  %v2040 = vunpack.c.l.b16 %v2008
  %v2041 = vunpack.c.l.b16 %v2009
  %v2042 = vunpack.c.l.b16 %v2010
  %v2043 = vunpack.c.l.b16 %v2011
  %v2044 = vpack.c.b16 %v2029, %v2028
  %v2045 = vpack.c.b16 %v2031, %v2030
  %v2046 = vpack.c.b16 %v2033, %v2032
  %v2047 = vpack.c.b16 %v2035, %v2034
  %v2048 = vpack.c.b16 %v2037, %v2036
  %v2049 = vpack.c.b16 %v2039, %v2038
  %v2050 = vpack.c.b16 %v2041, %v2040
  %v2051 = vpack.c.b16 %v2043, %v2042
  %2060 = vmatprep.subr.bf16.mxu0 0
  %2061 = vmatpush1.bf16.msra.mxu0 %v2051
  %2062 = vmatprep.subr.bf16.mxu0 0
  %2063 = vmatpush1.bf16.msra.mxu0 %v2050
  %2064 = vmatprep.subr.bf16.mxu0 0
  %2065 = vmatpush1.bf16.msra.mxu0 %v2049
  %2066 = vmatprep.subr.bf16.mxu0 0
  %2067 = vmatpush1.bf16.msra.mxu0 %v2048
  %2068 = vmatprep.subr.bf16.mxu0 0
  %2069 = vmatpush1.bf16.msra.mxu0 %v2047
  %2070 = vmatprep.subr.bf16.mxu0 0
  %2071 = vmatpush1.bf16.msra.mxu0 %v2046
  %2072 = vmatprep.subr.bf16.mxu0 0
  %2073 = vmatpush1.bf16.msra.mxu0 %v2045
  %2074 = vmatprep.subr.bf16.mxu0 0
  %2075 = vmatpush1.bf16.msra.mxu0 %v2044
  %2076 = vmatprep.subr.bf16.mxu0 0
  %2077 = vmatpush2.bf16.msra.mxu0 0
  %2078 = vmatprep.subr.bf16.mxu0 0
  %2079 = vmatpush2.bf16.msra.mxu0 0
  %2080 = vmatprep.subr.bf16.mxu0 0
  %2081 = vmatpush2.bf16.msra.mxu0 0
  %2082 = vmatprep.subr.bf16.mxu0 0
  %2083 = vmatpush2.bf16.msra.mxu0 0
  %2084 = vmatprep.subr.bf16.mxu0 0
  %2085 = vmatpush2.bf16.msra.mxu0 0
  %2086 = vmatprep.subr.bf16.mxu0 0
  %2087 = vmatpush2.bf16.msra.mxu0 0
  %2088 = vmatprep.subr.bf16.mxu0 0
  %2089 = vmatpush2.bf16.msra.mxu0 0
  %2090 = vmatprep.subr.bf16.mxu0 0
  %2091 = vmatpush2.bf16.msra.mxu0 0
  %2092 = vmatprep.mubr.bf16.mxu0 0
  %2093 = vmatmul.mubr.bf16.gmra.mxu0 %v1995
  %v2094 = vpop.f32.mrf.mxu0
  %v2095 = vadd.f32 0.0, %v2094
  %v2096 = vpop.f32.mrf.mxu0
  %v2097 = vpop.f32.mrf.mxu0
  %v2098 = vpop.f32.mrf.mxu0
  %2099 = vdwg.mxu0
  %v2100 = vadd.f32 %v1990, %v2095
  %v2101 = vld [vmem:[%s16] sm:$0x1]
  %v2103 = vlaneseq
  %v2104 = vshrl.u32 %v2103, 7
  %v2105 = vsub.s32 0, %v2104
  %v2106 = vrot.slane %v2101, %v2105
  %v2108 = vadd.f32 %v2100, %v2106
  %v2109 = vmax.f32 %v2108, 0.0
  %v2110 = vpack.c.bf16 %v2109, %v2109
  %v2111 = vld [vmem:[%s17] sm:$0xf]
  %v2112 = vld [vmem:[%s17 + $0x4] sm:$0xf]
  %v2113 = vld [vmem:[%s17 + $0x8] sm:$0xf]
  %v2114 = vld [vmem:[%s17 + $0xc] sm:$0xf]
  %v2115 = vld [vmem:[%s17 + $0x10] sm:$0xf]
  %v2116 = vld [vmem:[%s17 + $0x14] sm:$0xf]
  %v2117 = vld [vmem:[%s17 + $0x18] sm:$0xf]
  %v2118 = vld [vmem:[%s17 + $0x1c] sm:$0xf]
  %v2119 = vld [vmem:[%s17 + $0x20] sm:$0xf]
  %v2120 = vld [vmem:[%s17 + $0x24] sm:$0xf]
  %v2121 = vld [vmem:[%s17 + $0x28] sm:$0xf]
  %v2122 = vld [vmem:[%s17 + $0x2c] sm:$0xf]
  %v2123 = vld [vmem:[%s17 + $0x30] sm:$0xf]
  %v2124 = vld [vmem:[%s17 + $0x34] sm:$0xf]
  %v2125 = vld [vmem:[%s17 + $0x38] sm:$0xf]
  %v2126 = vld [vmem:[%s17 + $0x3c] sm:$0xf]
  %v2127 = vld [vmem:[%s18] sm:$0x1]
  %v2129 = vlaneseq
  %v2130 = vshrl.u32 %v2129, 7
  %v2131 = vsub.s32 0, %v2130
  %v2132 = vrot.slane %v2127, %v2131
  %v2150 = vunpack.c.l.b16 %v2111
  %v2151 = vunpack.c.l.b16 %v2112
  %v2152 = vunpack.c.l.b16 %v2113
  %v2153 = vunpack.c.l.b16 %v2114
  %v2154 = vunpack.c.l.b16 %v2115
  %v2155 = vunpack.c.l.b16 %v2116
  %v2156 = vunpack.c.l.b16 %v2117
  %v2157 = vunpack.c.l.b16 %v2118
  %v2158 = vunpack.c.l.b16 %v2119
  %v2159 = vunpack.c.l.b16 %v2120
  %v2160 = vunpack.c.l.b16 %v2121
  %v2161 = vunpack.c.l.b16 %v2122
  %v2162 = vunpack.c.l.b16 %v2123
  %v2163 = vunpack.c.l.b16 %v2124
  %v2164 = vunpack.c.l.b16 %v2125
  %v2165 = vunpack.c.l.b16 %v2126
  %v2166 = vpack.c.b16 %v2151, %v2150
  %v2167 = vpack.c.b16 %v2153, %v2152
  %v2168 = vpack.c.b16 %v2155, %v2154
  %v2169 = vpack.c.b16 %v2157, %v2156
  %v2170 = vpack.c.b16 %v2159, %v2158
  %v2171 = vpack.c.b16 %v2161, %v2160
  %v2172 = vpack.c.b16 %v2163, %v2162
  %v2173 = vpack.c.b16 %v2165, %v2164
  %2182 = vmatprep.subr.bf16.mxu0 0
  %2183 = vmatpush1.bf16.msra.mxu0 %v2173
  %2184 = vmatprep.subr.bf16.mxu0 0
  %2185 = vmatpush1.bf16.msra.mxu0 %v2172
  %2186 = vmatprep.subr.bf16.mxu0 0
  %2187 = vmatpush1.bf16.msra.mxu0 %v2171
  %2188 = vmatprep.subr.bf16.mxu0 0
  %2189 = vmatpush1.bf16.msra.mxu0 %v2170
  %2190 = vmatprep.subr.bf16.mxu0 0
  %2191 = vmatpush1.bf16.msra.mxu0 %v2169
  %2192 = vmatprep.subr.bf16.mxu0 0
  %2193 = vmatpush1.bf16.msra.mxu0 %v2168
  %2194 = vmatprep.subr.bf16.mxu0 0
  %2195 = vmatpush1.bf16.msra.mxu0 %v2167
  %2196 = vmatprep.subr.bf16.mxu0 0
  %2197 = vmatpush1.bf16.msra.mxu0 %v2166
  %2198 = vmatprep.subr.bf16.mxu0 0
  %2199 = vmatpush2.bf16.msra.mxu0 0
  %2200 = vmatprep.subr.bf16.mxu0 0
  %2201 = vmatpush2.bf16.msra.mxu0 0
  %2202 = vmatprep.subr.bf16.mxu0 0
  %2203 = vmatpush2.bf16.msra.mxu0 0
  %2204 = vmatprep.subr.bf16.mxu0 0
  %2205 = vmatpush2.bf16.msra.mxu0 0
  %2206 = vmatprep.subr.bf16.mxu0 0
  %2207 = vmatpush2.bf16.msra.mxu0 0
  %2208 = vmatprep.subr.bf16.mxu0 0
  %2209 = vmatpush2.bf16.msra.mxu0 0
  %2210 = vmatprep.subr.bf16.mxu0 0
  %2211 = vmatpush2.bf16.msra.mxu0 0
  %2212 = vmatprep.subr.bf16.mxu0 0
  %2213 = vmatpush2.bf16.msra.mxu0 0
  %2214 = vmatprep.mubr.bf16.mxu0 0
  %2215 = vmatmul.mubr.bf16.gmra.mxu0 %v2110
  %v2216 = vpop.f32.mrf.mxu0
  %v2217 = vadd.f32 %v2132, %v2216
  %v2218 = vpop.f32.mrf.mxu0
  %v2219 = vpop.f32.mrf.mxu0
  %v2220 = vpop.f32.mrf.mxu0
  %2221 = vdwg.mxu0
  %v2222 = vmax.f32 %v2217, 0.0
  %v2223 = vpack.c.bf16 %v2222, %v2222
  %v2224 = vld [vmem:[%s19] sm:$0xf]
  %v2225 = vld [vmem:[%s19 + $0x4] sm:$0xf]
  %v2226 = vld [vmem:[%s19 + $0x8] sm:$0xf]
  %v2227 = vld [vmem:[%s19 + $0xc] sm:$0xf]
  %v2228 = vld [vmem:[%s19 + $0x10] sm:$0xf]
  %v2229 = vld [vmem:[%s19 + $0x14] sm:$0xf]
  %v2230 = vld [vmem:[%s19 + $0x18] sm:$0xf]
  %v2231 = vld [vmem:[%s19 + $0x1c] sm:$0xf]
  %v2232 = vld [vmem:[%s19 + $0x20] sm:$0xf]
  %v2233 = vld [vmem:[%s19 + $0x24] sm:$0xf]
  %v2234 = vld [vmem:[%s19 + $0x28] sm:$0xf]
  %v2235 = vld [vmem:[%s19 + $0x2c] sm:$0xf]
  %v2236 = vld [vmem:[%s19 + $0x30] sm:$0xf]
  %v2237 = vld [vmem:[%s19 + $0x34] sm:$0xf]
  %v2238 = vld [vmem:[%s19 + $0x38] sm:$0xf]
  %v2239 = vld [vmem:[%s19 + $0x3c] sm:$0xf]
  %v2240 = vld [vmem:[%s20] sm:$0x1]
  %v2242 = vlaneseq
  %v2243 = vshrl.u32 %v2242, 7
  %v2244 = vsub.s32 0, %v2243
  %v2245 = vrot.slane %v2240, %v2244
  %v2263 = vunpack.c.l.b16 %v2224
  %v2264 = vunpack.c.l.b16 %v2225
  %v2265 = vunpack.c.l.b16 %v2226
  %v2266 = vunpack.c.l.b16 %v2227
  %v2267 = vunpack.c.l.b16 %v2228
  %v2268 = vunpack.c.l.b16 %v2229
  %v2269 = vunpack.c.l.b16 %v2230
  %v2270 = vunpack.c.l.b16 %v2231
  %v2271 = vunpack.c.l.b16 %v2232
  %v2272 = vunpack.c.l.b16 %v2233
  %v2273 = vunpack.c.l.b16 %v2234
  %v2274 = vunpack.c.l.b16 %v2235
  %v2275 = vunpack.c.l.b16 %v2236
  %v2276 = vunpack.c.l.b16 %v2237
  %v2277 = vunpack.c.l.b16 %v2238
  %v2278 = vunpack.c.l.b16 %v2239
  %v2279 = vpack.c.b16 %v2264, %v2263
  %v2280 = vpack.c.b16 %v2266, %v2265
  %v2281 = vpack.c.b16 %v2268, %v2267
  %v2282 = vpack.c.b16 %v2270, %v2269
  %v2283 = vpack.c.b16 %v2272, %v2271
  %v2284 = vpack.c.b16 %v2274, %v2273
  %v2285 = vpack.c.b16 %v2276, %v2275
  %v2286 = vpack.c.b16 %v2278, %v2277
  %2295 = vmatprep.subr.bf16.mxu0 0
  %2296 = vmatpush1.bf16.msra.mxu0 %v2286
  %2297 = vmatprep.subr.bf16.mxu0 0
  %2298 = vmatpush1.bf16.msra.mxu0 %v2285
  %2299 = vmatprep.subr.bf16.mxu0 0
  %2300 = vmatpush1.bf16.msra.mxu0 %v2284
  %2301 = vmatprep.subr.bf16.mxu0 0
  %2302 = vmatpush1.bf16.msra.mxu0 %v2283
  %2303 = vmatprep.subr.bf16.mxu0 0
  %2304 = vmatpush1.bf16.msra.mxu0 %v2282
  %2305 = vmatprep.subr.bf16.mxu0 0
  %2306 = vmatpush1.bf16.msra.mxu0 %v2281
  %2307 = vmatprep.subr.bf16.mxu0 0
  %2308 = vmatpush1.bf16.msra.mxu0 %v2280
  %2309 = vmatprep.subr.bf16.mxu0 0
  %2310 = vmatpush1.bf16.msra.mxu0 %v2279
  %2311 = vmatprep.subr.bf16.mxu0 0
  %2312 = vmatpush2.bf16.msra.mxu0 0
  %2313 = vmatprep.subr.bf16.mxu0 0
  %2314 = vmatpush2.bf16.msra.mxu0 0
  %2315 = vmatprep.subr.bf16.mxu0 0
  %2316 = vmatpush2.bf16.msra.mxu0 0
  %2317 = vmatprep.subr.bf16.mxu0 0
  %2318 = vmatpush2.bf16.msra.mxu0 0
  %2319 = vmatprep.subr.bf16.mxu0 0
  %2320 = vmatpush2.bf16.msra.mxu0 0
  %2321 = vmatprep.subr.bf16.mxu0 0
  %2322 = vmatpush2.bf16.msra.mxu0 0
  %2323 = vmatprep.subr.bf16.mxu0 0
  %2324 = vmatpush2.bf16.msra.mxu0 0
  %2325 = vmatprep.subr.bf16.mxu0 0
  %2326 = vmatpush2.bf16.msra.mxu0 0
  %2327 = vmatprep.mubr.bf16.mxu0 0
  %2328 = vmatmul.mubr.bf16.gmra.mxu0 %v2223
  %v2329 = vpop.f32.mrf.mxu0
  %v2330 = vadd.f32 %v2245, %v2329
  %v2331 = vpop.f32.mrf.mxu0
  %v2332 = vpop.f32.mrf.mxu0
  %v2333 = vpop.f32.mrf.mxu0
  %2334 = vdwg.mxu0
  %2335 = vst [vmem:[%s21] sm:$0xff] %v2330
  // Predicated region
  $region86: #{gin_forward.1} parent=0 // pred_check
    _
  $region87: #{gin_forward.1} parent=0 // pred_check_branch
    %2337 = sbr.rel (0) target = $region89
  $region88: #{gin_forward.1} parent=0 // pred_region
    _
  $region89: #{gin_forward.1} parent=0 // pred_fallthru
    _
  // Predicated region
  $region90: #{gin_forward.1} parent=0 // pred_check
    _
  $region91: #{gin_forward.1} parent=0 // pred_check_branch
    %2339 = sbr.rel (0) target = $region93
  $region92: #{gin_forward.1} parent=0 // pred_region
    _
  $region93: #{gin_forward.1} parent=0 // pred_fallthru
    _

</llo_original>
